<compile_context>
chip_gen: v6e
topology: v6e:2x2x1
jax: 0.10.0
libtpu: 0.0.40
codegen_flags: <defaults>
</compile_context>

<pallas_src>
import functools
import math

import jax
import jax.numpy as jnp
from jax.experimental import pallas as pl
from jax.experimental.pallas import tpu as pltpu

DIM = 32                       # model dim (true features)
NUM_HEADS = 4
HEAD_DIM = DIM // NUM_HEADS    # 8
MLP_RATIO = 4.0
HIDDEN = int(DIM * MLP_RATIO)  # 128 (already lane-dense)
LN_EPS = 1e-5
D_PAD = 128                    # lane-dense padded feature dim


def _gelu_exact(x):
    # nn.GELU default (erf-based, not tanh approximation)
    return 0.5 * x * (1.0 + jax.lax.erf(x * 0.7071067811865476))


def encoder_layer_kernel(x_ref, hmask_ref,
                         ln1_w_ref, ln1_b_ref,
                         wqkv_ref, bqkv_ref,
                         wo_ref, bo_ref,
                         ln2_w_ref, ln2_b_ref,
                         w1_ref, b1_ref,
                         w2_ref, b2_ref,
                         out_ref,
                         *, true_dim, num_heads):
    Bt, L, Dp = x_ref.shape
    N = Bt * L
    H = num_heads
    G = Bt * H

    x = x_ref[...].reshape(N, Dp)              # leading-dim merge only (layout preserving)
    if x.dtype != jnp.float32:
        x = x.astype(jnp.float32)

    # LayerNorm statistics must ignore the zero-padded lanes (features >= true_dim).
    feat_mask = jax.lax.broadcasted_iota(jnp.int32, (1, Dp), 1) < true_dim
    inv_d = 1.0 / true_dim

    def layer_norm(z, w, b):
        mu = jnp.sum(z, axis=-1, keepdims=True) * inv_d
        diff = jnp.where(feat_mask, z - mu, 0.0)
        var = jnp.sum(diff * diff, axis=-1, keepdims=True) * inv_d
        # w, b are zero-padded -> padded lanes of the result stay exactly zero.
        return diff * jax.lax.rsqrt(var + LN_EPS) * w + b

    # bind small params once (broadcasts are not CSE'd by JAX)
    ln1_w = ln1_w_ref[...]; ln1_b = ln1_b_ref[...]
    ln2_w = ln2_w_ref[...]; ln2_b = ln2_b_ref[...]
    bqkv = bqkv_ref[...]; bo = bo_ref[...]; b1 = b1_ref[...]; b2 = b2_ref[...]
    hmask = hmask_ref[...]                     # (H, 1, Dp) f32; head h hot on lanes [h*hd,(h+1)*hd)

    # ---- norm1 ----
    xn = layer_norm(x, ln1_w, ln1_b)                                   # (N, Dp) f32

    # ---- packed QKV projection: single (N,128) @ (128,384) matmul (scale folded into q) ----
    qkv = jnp.dot(xn.astype(jnp.bfloat16), wqkv_ref[...],
                  preferred_element_type=jnp.float32) + bqkv           # (N, 3*Dp) f32
    # lane-aligned 128-wide slices (whole-vreg selects), then free leading-dim splits
    q = qkv[:, 0 * Dp:1 * Dp].reshape(Bt, L, Dp)
    k = qkv[:, 1 * Dp:2 * Dp].reshape(Bt, L, Dp)
    v = qkv[:, 2 * Dp:3 * Dp].reshape(Bt, L, Dp)

    # ---- heads-batched attention via per-head lane masks (no relayout, no per-head weights) ----
    # Masking q and v suffices: cross-head lanes contribute exact zeros to the contractions.
    m4 = hmask[None]                                                   # (1, H, 1, Dp)
    q_h = (q[:, None] * m4).reshape(G, L, Dp).astype(jnp.bfloat16)
    k_h = jnp.broadcast_to(k[:, None], (Bt, H, L, Dp)).reshape(G, L, Dp).astype(jnp.bfloat16)
    v_h = (v[:, None] * m4).reshape(G, L, Dp).astype(jnp.bfloat16)

    s = jnp.einsum('gqd,gkd->gqk', q_h, k_h,
                   preferred_element_type=jnp.float32)                 # (G, L, L) f32
    s = s - jnp.max(s, axis=-1, keepdims=True)
    p = jnp.exp(s)
    p = p * pl.reciprocal(jnp.sum(p, axis=-1, keepdims=True), approx=True)

    ctx = jnp.einsum('gqk,gkd->gqd', p.astype(jnp.bfloat16), v_h,
                     preferred_element_type=jnp.float32)               # (G, L, Dp)
    # Heads occupy disjoint lanes -> summing over the head axis packs (N, H*hd) back into lanes 0..31.
    ctx_p = jnp.sum(ctx.reshape(Bt, H, L, Dp), axis=1).reshape(N, Dp)

    # ---- fused output projection: single (N,128) @ (128,128) matmul ----
    attn = jnp.dot(ctx_p.astype(jnp.bfloat16), wo_ref[...],
                   preferred_element_type=jnp.float32) + bo

    # ---- residual 1 ----
    x = x + attn

    # ---- norm2 + MLP ----
    xn2 = layer_norm(x, ln2_w, ln2_b)
    hdn = jnp.dot(xn2.astype(jnp.bfloat16), w1_ref[...],
                  preferred_element_type=jnp.float32) + b1
    hdn = _gelu_exact(hdn)
    mlp = jnp.dot(hdn.astype(jnp.bfloat16), w2_ref[...],
                  preferred_element_type=jnp.float32) + b2

    # ---- residual 2 ----
    out_ref[...] = (x + mlp).reshape(Bt, L, Dp).astype(out_ref.dtype)


def _pad_to(a, shape):
    return jnp.pad(a, [(0, t - s) for s, t in zip(a.shape, shape)])


def _pick_batch_tile(batch, seq_len, target_rows=256):
    """VMEM-budgeted batch tile: ~target_rows residual rows per grid step."""
    bt = max(1, min(batch, target_rows // max(seq_len, 1)))
    while batch % bt:            # largest divisor of batch not exceeding the budget
        bt -= 1
    steps = batch // bt
    if steps == 1 and batch >= 2 and batch % 2 == 0:
        bt, steps = batch // 2, 2   # even parallel trip count: feeds both v7x TensorCores
    return bt, steps


def transformer_encoder_layer(x, params):
    """x: (B, L, DIM) float32 (batch_first). Returns (B, L, DIM)."""
    B, L, D = x.shape
    assert D == DIM

    Bt, n_steps = _pick_batch_tile(B, L)

    f32, bf16 = jnp.float32, jnp.bfloat16
    scale = 1.0 / math.sqrt(HEAD_DIM)

    # ---- lane-dense padding of the residual stream: DIM -> D_PAD ----
    x_pad = _pad_to(x.astype(f32), (B, L, D_PAD))

    ln1_w = _pad_to(params["ln1_w"], (D_PAD,)).reshape(1, D_PAD).astype(f32)
    ln1_b = _pad_to(params["ln1_b"], (D_PAD,)).reshape(1, D_PAD).astype(f32)
    ln2_w = _pad_to(params["ln2_w"], (D_PAD,)).reshape(1, D_PAD).astype(f32)
    ln2_b = _pad_to(params["ln2_b"], (D_PAD,)).reshape(1, D_PAD).astype(f32)

    # ---- packed QKV weight (D_PAD, 3*D_PAD): q|k|v slabs, heads on lanes 0..D-1 of each ----
    wq = params["w_qkv"][:, 0 * D:1 * D] * scale        # fold 1/sqrt(head_dim) into q
    wk = params["w_qkv"][:, 1 * D:2 * D]
    wv = params["w_qkv"][:, 2 * D:3 * D]
    wqkv = jnp.zeros((D_PAD, 3 * D_PAD), f32)
    wqkv = wqkv.at[:D, 0 * D_PAD:0 * D_PAD + D].set(wq)
    wqkv = wqkv.at[:D, 1 * D_PAD:1 * D_PAD + D].set(wk)
    wqkv = wqkv.at[:D, 2 * D_PAD:2 * D_PAD + D].set(wv)

    bq = params["b_qkv"][0 * D:1 * D] * scale
    bk = params["b_qkv"][1 * D:2 * D]
    bv = params["b_qkv"][2 * D:3 * D]
    bqkv = jnp.zeros((1, 3 * D_PAD), f32)
    bqkv = bqkv.at[0, 0 * D_PAD:0 * D_PAD + D].set(bq)
    bqkv = bqkv.at[0, 1 * D_PAD:1 * D_PAD + D].set(bk)
    bqkv = bqkv.at[0, 2 * D_PAD:2 * D_PAD + D].set(bv)

    # ---- fused output projection (128,128); packed ctx lanes 0..31 match PyTorch head concat ----
    wo = jnp.zeros((D_PAD, D_PAD), f32).at[:D, :D].set(params["w_out"])
    b_out = _pad_to(params["b_out"], (D_PAD,)).reshape(1, D_PAD).astype(f32)

    # ---- MLP weights (HIDDEN == 128 already lane-dense) ----
    w1 = _pad_to(params["w_fc1"], (D_PAD, HIDDEN)).astype(f32)
    b1 = params["b_fc1"].reshape(1, HIDDEN).astype(f32)
    w2 = _pad_to(params["w_fc2"], (HIDDEN, D_PAD)).astype(f32)
    b2 = _pad_to(params["b_fc2"], (D_PAD,)).reshape(1, D_PAD).astype(f32)

    # ---- per-head lane masks: head h hot on lanes [h*HEAD_DIM, (h+1)*HEAD_DIM) ----
    lane = jnp.arange(D_PAD)[None, None, :]
    head = jnp.arange(NUM_HEADS)[:, None, None]
    head_mask = ((lane >= head * HEAD_DIM) & (lane < (head + 1) * HEAD_DIM)).astype(f32)

    # matmul weights travel as bf16; kernel accumulates in f32
    wqkv, wo, w1, w2 = (t.astype(bf16) for t in (wqkv, wo, w1, w2))

    plist = [head_mask, ln1_w, ln1_b, wqkv, bqkv, wo, b_out,
             ln2_w, ln2_b, w1, b1, w2, b2]

    # Replicated weights: constant index maps -> the pipeline fetches each block once and keeps
    # it resident across grid steps (explicit pl.Buffered(1) would only shave ~0.1 MiB; skipped).
    def rep_spec(p):
        nd = p.ndim
        return pl.BlockSpec(p.shape, lambda g, nd=nd: (0,) * nd)

    in_specs = [pl.BlockSpec((Bt, L, D_PAD), lambda g: (g, 0, 0))]
    in_specs += [rep_spec(p) for p in plist]
    out_spec = pl.BlockSpec((Bt, L, D_PAD), lambda g: (g, 0, 0))

    kernel = functools.partial(encoder_layer_kernel, true_dim=D, num_heads=NUM_HEADS)

    # ---- VMEM budget / cost estimate ----
    rows = Bt * L
    g_heads = Bt * NUM_HEADS
    weight_bytes = sum(int(p.size) * p.dtype.itemsize for p in plist)
    act_bytes = (2 * 2 * rows * D_PAD * 4          # double-buffered in/out blocks (f32)
                 + rows * 3 * D_PAD * 4            # qkv (f32)
                 + 3 * g_heads * L * D_PAD * 2     # per-head q/k/v (bf16)
                 + 2 * g_heads * L * L * 4         # scores + probs (f32)
                 + g_heads * L * D_PAD * 4         # ctx (f32)
                 + 6 * rows * D_PAD * 4)           # LN / MLP / residual temporaries
    vmem_limit = int(min(64 * 2**20, max(32 * 2**20, 2 * (2 * weight_bytes + act_bytes))))

    flops = int(2 * B * L * D * (4 * D + 2 * HIDDEN) + 4 * B * NUM_HEADS * L * L * HEAD_DIM)
    transcendentals = int(B * L * HIDDEN + B * NUM_HEADS * L * L)
    bytes_accessed = int(2 * B * L * D_PAD * 4 + weight_bytes)

    out_pad = pl.pallas_call(
        kernel,
        out_shape=jax.ShapeDtypeStruct((B, L, D_PAD), x.dtype),
        grid_spec=pltpu.PrefetchScalarGridSpec(
            num_scalar_prefetch=0,
            grid=(n_steps,),
            in_specs=in_specs,
            out_specs=out_spec,
        ),
        compiler_params=pltpu.CompilerParams(
            dimension_semantics=("parallel",),
            vmem_limit_bytes=vmem_limit),
        cost_estimate=pl.CostEstimate(
            flops=flops,
            transcendentals=transcendentals,
            bytes_accessed=bytes_accessed),
    )(x_pad, *plist)

    return out_pad[:, :, :D]


def init_params(key, dim=DIM, hidden=HIDDEN):
    ks = jax.random.split(key, 8)
    std = 0.02
    return {
        "ln1_w": jnp.ones((dim,), jnp.float32),
        "ln1_b": jnp.zeros((dim,), jnp.float32),
        "ln2_w": jnp.ones((dim,), jnp.float32),
        "ln2_b": jnp.zeros((dim,), jnp.float32),
        # MultiheadAttention in_proj (3*dim, dim) stored transposed -> (dim, 3*dim)
        "w_qkv": std * jax.random.normal(ks[0], (dim, 3 * dim), jnp.float32),
        "b_qkv": std * jax.random.normal(ks[1], (3 * dim,), jnp.float32),
        # out_proj stored transposed -> (dim, dim)
        "w_out": std * jax.random.normal(ks[2], (dim, dim), jnp.float32),
        "b_out": std * jax.random.normal(ks[3], (dim,), jnp.float32),
        # Mlp: fc1 -> (dim, hidden); fc2 -> (hidden, dim) (pre-transposed)
        "w_fc1": std * jax.random.normal(ks[4], (dim, hidden), jnp.float32),
        "b_fc1": std * jax.random.normal(ks[5], (hidden,), jnp.float32),
        "w_fc2": std * jax.random.normal(ks[6], (hidden, dim), jnp.float32),
        "b_fc2": std * jax.random.normal(ks[7], (dim,), jnp.float32),
    }


def reference_forward(x, params):
    """Pure-JAX f32 reference matching the PyTorch module's forward."""
    B, L, D = x.shape
    H, hd = NUM_HEADS, HEAD_DIM

    def ln(z, w, b):
        mu = z.mean(-1, keepdims=True)
        var = ((z - mu) ** 2).mean(-1, keepdims=True)
        return (z - mu) / jnp.sqrt(var + LN_EPS) * w + b

    xn = ln(x, params["ln1_w"], params["ln1_b"])
    qkv = xn @ params["w_qkv"] + params["b_qkv"]
    q, k, v = jnp.split(qkv, 3, axis=-1)

    def heads(t):
        return t.reshape(B, L, H, hd).transpose(0, 2, 1, 3)

    qh, kh, vh = heads(q), heads(k), heads(v)
    s = jnp.einsum('bhqd,bhkd->bhqk', qh, kh) / math.sqrt(hd)
    p = jax.nn.softmax(s, axis=-1)
    ctx = jnp.einsum('bhqk,bhkd->bhqd', p, vh)
    ctx = ctx.transpose(0, 2, 1, 3).reshape(B, L, D)
    attn = ctx @ params["w_out"] + params["b_out"]
    x1 = x + attn
    xn2 = ln(x1, params["ln2_w"], params["ln2_b"])
    h1 = xn2 @ params["w_fc1"] + params["b_fc1"]
    h1 = _gelu_exact(h1)
    mlp = h1 @ params["w_fc2"] + params["b_fc2"]
    return x1 + mlp


if __name__ == "__main__":
    key = jax.random.PRNGKey(0)
    k_x, k_p = jax.random.split(key)

    B, L = 2, 8
    x = jax.random.normal(k_x, (B, L, DIM), jnp.float32)
    params = init_params(k_p)

    out = transformer_encoder_layer(x, params)
    jax.block_until_ready(out)
    assert out.shape == (B, L, DIM) and out.dtype == jnp.float32

    ref = reference_forward(x, params)
    err = float(jnp.max(jnp.abs(out - ref)))
    assert jnp.allclose(out, ref, atol=2e-2, rtol=2e-2), f"max abs err {err}"

    print("KERNEL_OK")
</pallas_src>

<mosaic_0001>
module attributes {stable_mosaic.version = 11 : i64} {
  func.func @encoder_layer_kernel(%arg0: i32, %arg1: memref<1x8x128xf32, #tpu.memory_space<vmem>>, %arg2: memref<4x1x128xf32, #tpu.memory_space<vmem>>, %arg3: memref<1x128xf32, #tpu.memory_space<vmem>>, %arg4: memref<1x128xf32, #tpu.memory_space<vmem>>, %arg5: memref<128x384xbf16, #tpu.memory_space<vmem>>, %arg6: memref<1x384xf32, #tpu.memory_space<vmem>>, %arg7: memref<128x128xbf16, #tpu.memory_space<vmem>>, %arg8: memref<1x128xf32, #tpu.memory_space<vmem>>, %arg9: memref<1x128xf32, #tpu.memory_space<vmem>>, %arg10: memref<1x128xf32, #tpu.memory_space<vmem>>, %arg11: memref<128x128xbf16, #tpu.memory_space<vmem>>, %arg12: memref<1x128xf32, #tpu.memory_space<vmem>>, %arg13: memref<128x128xbf16, #tpu.memory_space<vmem>>, %arg14: memref<1x128xf32, #tpu.memory_space<vmem>>, %arg15: memref<1x8x128xf32, #tpu.memory_space<vmem>>) attributes {dimension_semantics = [#tpu.dimension_semantics<parallel>], iteration_bounds = array<i64: 2>, scalar_prefetch = 0 : i64, scratch_operands = 0 : i64, tpu.core_type = #tpu.core_type<tc>, window_params = [{transform_indices = @transform_0, window_bounds = array<i64: 1, 8, 128>}, {pipeline_mode = #tpu.pipeline_mode<synchronous>, transform_indices = @transform_1, window_bounds = array<i64: 4, 1, 128>}, {pipeline_mode = #tpu.pipeline_mode<synchronous>, transform_indices = @transform_2, window_bounds = array<i64: 1, 128>}, {pipeline_mode = #tpu.pipeline_mode<synchronous>, transform_indices = @transform_3, window_bounds = array<i64: 1, 128>}, {pipeline_mode = #tpu.pipeline_mode<synchronous>, transform_indices = @transform_4, window_bounds = array<i64: 128, 384>}, {pipeline_mode = #tpu.pipeline_mode<synchronous>, transform_indices = @transform_5, window_bounds = array<i64: 1, 384>}, {pipeline_mode = #tpu.pipeline_mode<synchronous>, transform_indices = @transform_6, window_bounds = array<i64: 128, 128>}, {pipeline_mode = #tpu.pipeline_mode<synchronous>, transform_indices = @transform_7, window_bounds = array<i64: 1, 128>}, {pipeline_mode = #tpu.pipeline_mode<synchronous>, transform_indices = @transform_8, window_bounds = array<i64: 1, 128>}, {pipeline_mode = #tpu.pipeline_mode<synchronous>, transform_indices = @transform_9, window_bounds = array<i64: 1, 128>}, {pipeline_mode = #tpu.pipeline_mode<synchronous>, transform_indices = @transform_10, window_bounds = array<i64: 128, 128>}, {pipeline_mode = #tpu.pipeline_mode<synchronous>, transform_indices = @transform_11, window_bounds = array<i64: 1, 128>}, {pipeline_mode = #tpu.pipeline_mode<synchronous>, transform_indices = @transform_12, window_bounds = array<i64: 128, 128>}, {pipeline_mode = #tpu.pipeline_mode<synchronous>, transform_indices = @transform_13, window_bounds = array<i64: 1, 128>}, {transform_indices = @transform_14, window_bounds = array<i64: 1, 8, 128>}]} {
    %c0 = arith.constant 0 : index
    %c0_0 = arith.constant 0 : index
    %c0_1 = arith.constant 0 : index
    %0 = vector.load %arg1[%c0, %c0_0, %c0_1] : memref<1x8x128xf32, #tpu.memory_space<vmem>>, vector<1x8x128xf32>
    %1 = vector.shape_cast %0 : vector<1x8x128xf32> to vector<8x128xf32>
    %2 = tpu.iota {dimensions = array<i32: 1>} : vector<1x128xi32>
    %c32_i32 = arith.constant 32 : i32
    %3 = vector.broadcast %c32_i32 : i32 to vector<1x128xi32>
    %4 = arith.cmpi slt, %2, %3 : vector<1x128xi32>
    %c0_2 = arith.constant 0 : index
    %c0_3 = arith.constant 0 : index
    %5 = vector.load %arg3[%c0_2, %c0_3] : memref<1x128xf32, #tpu.memory_space<vmem>>, vector<1x128xf32>
    %c0_4 = arith.constant 0 : index
    %c0_5 = arith.constant 0 : index
    %6 = vector.load %arg4[%c0_4, %c0_5] : memref<1x128xf32, #tpu.memory_space<vmem>>, vector<1x128xf32>
    %c0_6 = arith.constant 0 : index
    %c0_7 = arith.constant 0 : index
    %7 = vector.load %arg9[%c0_6, %c0_7] : memref<1x128xf32, #tpu.memory_space<vmem>>, vector<1x128xf32>
    %c0_8 = arith.constant 0 : index
    %c0_9 = arith.constant 0 : index
    %8 = vector.load %arg10[%c0_8, %c0_9] : memref<1x128xf32, #tpu.memory_space<vmem>>, vector<1x128xf32>
    %c0_10 = arith.constant 0 : index
    %c0_11 = arith.constant 0 : index
    %9 = vector.load %arg6[%c0_10, %c0_11] : memref<1x384xf32, #tpu.memory_space<vmem>>, vector<1x384xf32>
    %c0_12 = arith.constant 0 : index
    %c0_13 = arith.constant 0 : index
    %10 = vector.load %arg8[%c0_12, %c0_13] : memref<1x128xf32, #tpu.memory_space<vmem>>, vector<1x128xf32>
    %c0_14 = arith.constant 0 : index
    %c0_15 = arith.constant 0 : index
    %11 = vector.load %arg12[%c0_14, %c0_15] : memref<1x128xf32, #tpu.memory_space<vmem>>, vector<1x128xf32>
    %c0_16 = arith.constant 0 : index
    %c0_17 = arith.constant 0 : index
    %12 = vector.load %arg14[%c0_16, %c0_17] : memref<1x128xf32, #tpu.memory_space<vmem>>, vector<1x128xf32>
    %c0_18 = arith.constant 0 : index
    %c0_19 = arith.constant 0 : index
    %c0_20 = arith.constant 0 : index
    %13 = vector.load %arg2[%c0_18, %c0_19, %c0_20] : memref<4x1x128xf32, #tpu.memory_space<vmem>>, vector<4x1x128xf32>
    %cst = arith.constant dense<0.000000e+00> : vector<8xf32>
    %14 = vector.multi_reduction <add>, %1, %cst [1] : vector<8x128xf32> to vector<8xf32>
    %15 = vector.shape_cast %14 : vector<8xf32> to vector<8x1xf32>
    %cst_21 = arith.constant 3.125000e-02 : f32
    %16 = vector.broadcast %cst_21 : f32 to vector<8x1xf32>
    %17 = arith.mulf %15, %16 : vector<8x1xf32>
    %18 = vector.broadcast %17 : vector<8x1xf32> to vector<8x128xf32>
    %19 = arith.subf %1, %18 : vector<8x128xf32>
    %cst_22 = arith.constant 0.000000e+00 : f32
    %20 = vector.shape_cast %4 : vector<1x128xi1> to vector<1x128xi1>
    %21 = vector.broadcast %20 : vector<1x128xi1> to vector<8x128xi1>
    %22 = vector.broadcast %cst_22 : f32 to vector<8x128xf32>
    %23 = arith.select %21, %19, %22 : vector<8x128xi1>, vector<8x128xf32>
    %24 = arith.mulf %23, %23 : vector<8x128xf32>
    %cst_23 = arith.constant dense<0.000000e+00> : vector<8xf32>
    %25 = vector.multi_reduction <add>, %24, %cst_23 [1] : vector<8x128xf32> to vector<8xf32>
    %26 = vector.shape_cast %25 : vector<8xf32> to vector<8x1xf32>
    %cst_24 = arith.constant 3.125000e-02 : f32
    %27 = vector.broadcast %cst_24 : f32 to vector<8x1xf32>
    %28 = arith.mulf %26, %27 : vector<8x1xf32>
    %cst_25 = arith.constant 9.99999974E-6 : f32
    %29 = vector.broadcast %cst_25 : f32 to vector<8x1xf32>
    %30 = arith.addf %28, %29 : vector<8x1xf32>
    %31 = math.rsqrt %30 : vector<8x1xf32>
    %32 = vector.broadcast %31 : vector<8x1xf32> to vector<8x128xf32>
    %33 = arith.mulf %23, %32 : vector<8x128xf32>
    %34 = vector.broadcast %5 : vector<1x128xf32> to vector<8x128xf32>
    %35 = arith.mulf %33, %34 : vector<8x128xf32>
    %36 = vector.broadcast %6 : vector<1x128xf32> to vector<8x128xf32>
    %37 = arith.addf %35, %36 : vector<8x128xf32>
    %38 = arith.truncf %37 : vector<8x128xf32> to vector<8x128xbf16>
    %c0_26 = arith.constant 0 : index
    %c0_27 = arith.constant 0 : index
    %39 = vector.load %arg5[%c0_26, %c0_27] : memref<128x384xbf16, #tpu.memory_space<vmem>>, vector<128x384xbf16>
    %cst_28 = arith.constant dense<0.000000e+00> : vector<8x384xf32>
    %40 = tpu.matmul %38, %39, %cst_28 {dimension_numbers = #tpu.dot_dimension_numbers<[1], [0], [0], [1], [0, 0, 1, 1], [], []>} : vector<8x128xbf16>, vector<128x384xbf16>, vector<8x384xf32> -> vector<8x384xf32>
    %41 = vector.broadcast %9 : vector<1x384xf32> to vector<8x384xf32>
    %42 = arith.addf %40, %41 : vector<8x384xf32>
    %43 = vector.extract_strided_slice %42 {offsets = [0, 0], sizes = [8, 128], strides = [1, 1]} : vector<8x384xf32> to vector<8x128xf32>
    %44 = vector.shape_cast %43 : vector<8x128xf32> to vector<1x8x128xf32>
    %45 = vector.extract_strided_slice %42 {offsets = [0, 128], sizes = [8, 128], strides = [1, 1]} : vector<8x384xf32> to vector<8x128xf32>
    %46 = vector.shape_cast %45 : vector<8x128xf32> to vector<1x8x128xf32>
    %47 = vector.extract_strided_slice %42 {offsets = [0, 256], sizes = [8, 128], strides = [1, 1]} : vector<8x384xf32> to vector<8x128xf32>
    %48 = vector.shape_cast %47 : vector<8x128xf32> to vector<1x8x128xf32>
    %49 = vector.shape_cast %13 : vector<4x1x128xf32> to vector<1x4x1x128xf32>
    %50 = vector.shape_cast %44 : vector<1x8x128xf32> to vector<1x1x8x128xf32>
    %51 = vector.broadcast %50 : vector<1x1x8x128xf32> to vector<1x4x8x128xf32>
    %52 = vector.broadcast %49 : vector<1x4x1x128xf32> to vector<1x4x8x128xf32>
    %53 = arith.mulf %51, %52 : vector<1x4x8x128xf32>
    %54 = vector.shape_cast %53 : vector<1x4x8x128xf32> to vector<4x8x128xf32>
    %55 = arith.truncf %54 : vector<4x8x128xf32> to vector<4x8x128xbf16>
    %56 = vector.shape_cast %46 : vector<1x8x128xf32> to vector<1x1x8x128xf32>
    %57 = vector.shape_cast %56 : vector<1x1x8x128xf32> to vector<1x1x8x128xf32>
    %58 = vector.broadcast %57 : vector<1x1x8x128xf32> to vector<1x4x8x128xf32>
    %59 = vector.shape_cast %58 : vector<1x4x8x128xf32> to vector<4x8x128xf32>
    %60 = arith.truncf %59 : vector<4x8x128xf32> to vector<4x8x128xbf16>
    %61 = vector.shape_cast %48 : vector<1x8x128xf32> to vector<1x1x8x128xf32>
    %62 = vector.broadcast %61 : vector<1x1x8x128xf32> to vector<1x4x8x128xf32>
    %63 = vector.broadcast %49 : vector<1x4x1x128xf32> to vector<1x4x8x128xf32>
    %64 = arith.mulf %62, %63 : vector<1x4x8x128xf32>
    %65 = vector.shape_cast %64 : vector<1x4x8x128xf32> to vector<4x8x128xf32>
    %66 = arith.truncf %65 : vector<4x8x128xf32> to vector<4x8x128xbf16>
    "tpu.trace_start"() <{level = 10 : i32, message = "gqd,gkd->gqk"}> : () -> ()
    %cst_29 = arith.constant dense<0.000000e+00> : vector<4x8x8xf32>
    %67 = tpu.matmul %55, %60, %cst_29 {dimension_numbers = #tpu.dot_dimension_numbers<[2], [2], [1], [1], [0, 0, 0, 1, 1, 1], [0], [0]>} : vector<4x8x128xbf16>, vector<4x8x128xbf16>, vector<4x8x8xf32> -> vector<4x8x8xf32>
    "tpu.trace_stop"() : () -> ()
    %cst_30 = arith.constant dense<0xFF800000> : vector<4x8xf32>
    %68 = vector.multi_reduction <maximumf>, %67, %cst_30 [2] : vector<4x8x8xf32> to vector<4x8xf32>
    %69 = vector.shape_cast %68 : vector<4x8xf32> to vector<4x8x1xf32>
    %70 = vector.broadcast %69 : vector<4x8x1xf32> to vector<4x8x8xf32>
    %71 = arith.subf %67, %70 : vector<4x8x8xf32>
    %72 = math.exp %71 : vector<4x8x8xf32>
    %cst_31 = arith.constant dense<0.000000e+00> : vector<4x8xf32>
    %73 = vector.multi_reduction <add>, %72, %cst_31 [2] : vector<4x8x8xf32> to vector<4x8xf32>
    %74 = vector.shape_cast %73 : vector<4x8xf32> to vector<4x8x1xf32>
    %75 = tpu.reciprocal %74 {approx = true} : vector<4x8x1xf32> -> vector<4x8x1xf32>
    %76 = vector.broadcast %75 : vector<4x8x1xf32> to vector<4x8x8xf32>
    %77 = arith.mulf %72, %76 : vector<4x8x8xf32>
    %78 = arith.truncf %77 : vector<4x8x8xf32> to vector<4x8x8xbf16>
    "tpu.trace_start"() <{level = 10 : i32, message = "gqk,gkd->gqd"}> : () -> ()
    %cst_32 = arith.constant dense<0.000000e+00> : vector<4x8x128xf32>
    %79 = tpu.matmul %78, %66, %cst_32 {dimension_numbers = #tpu.dot_dimension_numbers<[2], [1], [1], [2], [0, 0, 0, 1, 1, 2], [0], [0]>} : vector<4x8x8xbf16>, vector<4x8x128xbf16>, vector<4x8x128xf32> -> vector<4x8x128xf32>
    "tpu.trace_stop"() : () -> ()
    %80 = vector.shape_cast %79 : vector<4x8x128xf32> to vector<1x4x8x128xf32>
    %cst_33 = arith.constant dense<0.000000e+00> : vector<1x8x128xf32>
    %81 = vector.multi_reduction <add>, %80, %cst_33 [1] : vector<1x4x8x128xf32> to vector<1x8x128xf32>
    %82 = vector.shape_cast %81 : vector<1x8x128xf32> to vector<8x128xf32>
    %83 = arith.truncf %82 : vector<8x128xf32> to vector<8x128xbf16>
    %c0_34 = arith.constant 0 : index
    %c0_35 = arith.constant 0 : index
    %84 = vector.load %arg7[%c0_34, %c0_35] : memref<128x128xbf16, #tpu.memory_space<vmem>>, vector<128x128xbf16>
    %cst_36 = arith.constant dense<0.000000e+00> : vector<8x128xf32>
    %85 = tpu.matmul %83, %84, %cst_36 {dimension_numbers = #tpu.dot_dimension_numbers<[1], [0], [0], [1], [0, 0, 1, 1], [], []>} : vector<8x128xbf16>, vector<128x128xbf16>, vector<8x128xf32> -> vector<8x128xf32>
    %86 = vector.broadcast %10 : vector<1x128xf32> to vector<8x128xf32>
    %87 = arith.addf %85, %86 : vector<8x128xf32>
    %88 = arith.addf %1, %87 : vector<8x128xf32>
    %cst_37 = arith.constant dense<0.000000e+00> : vector<8xf32>
    %89 = vector.multi_reduction <add>, %88, %cst_37 [1] : vector<8x128xf32> to vector<8xf32>
    %90 = vector.shape_cast %89 : vector<8xf32> to vector<8x1xf32>
    %cst_38 = arith.constant 3.125000e-02 : f32
    %91 = vector.broadcast %cst_38 : f32 to vector<8x1xf32>
    %92 = arith.mulf %90, %91 : vector<8x1xf32>
    %93 = vector.broadcast %92 : vector<8x1xf32> to vector<8x128xf32>
    %94 = arith.subf %88, %93 : vector<8x128xf32>
    %cst_39 = arith.constant 0.000000e+00 : f32
    %95 = vector.shape_cast %4 : vector<1x128xi1> to vector<1x128xi1>
    %96 = vector.broadcast %95 : vector<1x128xi1> to vector<8x128xi1>
    %97 = vector.broadcast %cst_39 : f32 to vector<8x128xf32>
    %98 = arith.select %96, %94, %97 : vector<8x128xi1>, vector<8x128xf32>
    %99 = arith.mulf %98, %98 : vector<8x128xf32>
    %cst_40 = arith.constant dense<0.000000e+00> : vector<8xf32>
    %100 = vector.multi_reduction <add>, %99, %cst_40 [1] : vector<8x128xf32> to vector<8xf32>
    %101 = vector.shape_cast %100 : vector<8xf32> to vector<8x1xf32>
    %cst_41 = arith.constant 3.125000e-02 : f32
    %102 = vector.broadcast %cst_41 : f32 to vector<8x1xf32>
    %103 = arith.mulf %101, %102 : vector<8x1xf32>
    %cst_42 = arith.constant 9.99999974E-6 : f32
    %104 = vector.broadcast %cst_42 : f32 to vector<8x1xf32>
    %105 = arith.addf %103, %104 : vector<8x1xf32>
    %106 = math.rsqrt %105 : vector<8x1xf32>
    %107 = vector.broadcast %106 : vector<8x1xf32> to vector<8x128xf32>
    %108 = arith.mulf %98, %107 : vector<8x128xf32>
    %109 = vector.broadcast %7 : vector<1x128xf32> to vector<8x128xf32>
    %110 = arith.mulf %108, %109 : vector<8x128xf32>
    %111 = vector.broadcast %8 : vector<1x128xf32> to vector<8x128xf32>
    %112 = arith.addf %110, %111 : vector<8x128xf32>
    %113 = arith.truncf %112 : vector<8x128xf32> to vector<8x128xbf16>
    %c0_43 = arith.constant 0 : index
    %c0_44 = arith.constant 0 : index
    %114 = vector.load %arg11[%c0_43, %c0_44] : memref<128x128xbf16, #tpu.memory_space<vmem>>, vector<128x128xbf16>
    %cst_45 = arith.constant dense<0.000000e+00> : vector<8x128xf32>
    %115 = tpu.matmul %113, %114, %cst_45 {dimension_numbers = #tpu.dot_dimension_numbers<[1], [0], [0], [1], [0, 0, 1, 1], [], []>} : vector<8x128xbf16>, vector<128x128xbf16>, vector<8x128xf32> -> vector<8x128xf32>
    %116 = vector.broadcast %11 : vector<1x128xf32> to vector<8x128xf32>
    %117 = arith.addf %115, %116 : vector<8x128xf32>
    %cst_46 = arith.constant 5.000000e-01 : f32
    %118 = vector.broadcast %cst_46 : f32 to vector<8x128xf32>
    %119 = arith.mulf %118, %117 : vector<8x128xf32>
    %cst_47 = arith.constant 0.707106769 : f32
    %120 = vector.broadcast %cst_47 : f32 to vector<8x128xf32>
    %121 = arith.mulf %117, %120 : vector<8x128xf32>
    %122 = math.erf %121 : vector<8x128xf32>
    %cst_48 = arith.constant 1.000000e+00 : f32
    %123 = vector.broadcast %cst_48 : f32 to vector<8x128xf32>
    %124 = arith.addf %123, %122 : vector<8x128xf32>
    %125 = arith.mulf %119, %124 : vector<8x128xf32>
    %126 = arith.truncf %125 : vector<8x128xf32> to vector<8x128xbf16>
    %c0_49 = arith.constant 0 : index
    %c0_50 = arith.constant 0 : index
    %127 = vector.load %arg13[%c0_49, %c0_50] : memref<128x128xbf16, #tpu.memory_space<vmem>>, vector<128x128xbf16>
    %cst_51 = arith.constant dense<0.000000e+00> : vector<8x128xf32>
    %128 = tpu.matmul %126, %127, %cst_51 {dimension_numbers = #tpu.dot_dimension_numbers<[1], [0], [0], [1], [0, 0, 1, 1], [], []>} : vector<8x128xbf16>, vector<128x128xbf16>, vector<8x128xf32> -> vector<8x128xf32>
    %129 = vector.broadcast %12 : vector<1x128xf32> to vector<8x128xf32>
    %130 = arith.addf %128, %129 : vector<8x128xf32>
    %131 = arith.addf %88, %130 : vector<8x128xf32>
    %132 = vector.shape_cast %131 : vector<8x128xf32> to vector<1x8x128xf32>
    %c0_52 = arith.constant 0 : index
    %c0_53 = arith.constant 0 : index
    %c0_54 = arith.constant 0 : index
    %133 = vector.load %arg15[%c0_52, %c0_53, %c0_54] : memref<1x8x128xf32, #tpu.memory_space<vmem>>, vector<1x8x128xf32>
    tpu.vector_store %arg15[%c0_52, %c0_53, %c0_54], %132 {strides = array<i32>} : memref<1x8x128xf32, #tpu.memory_space<vmem>>, vector<1x8x128xf32>,
    return
  }
  func.func @transform_0(%arg0: i32) -> (i32, i32, i32) {
    %c0_i32 = arith.constant 0 : i32
    %c0_i32_0 = arith.constant 0 : i32
    %c0_i32_1 = arith.constant 0 : i32
    return %arg0, %c0_i32, %c0_i32_0 : i32, i32, i32
  }
  func.func @transform_1(%arg0: i32) -> (i32, i32, i32) {
    %c0_i32 = arith.constant 0 : i32
    %c0_i32_0 = arith.constant 0 : i32
    %c0_i32_1 = arith.constant 0 : i32
    %c0_i32_2 = arith.constant 0 : i32
    return %c0_i32, %c0_i32_0, %c0_i32_1 : i32, i32, i32
  }
  func.func @transform_2(%arg0: i32) -> (i32, i32) {
    %c0_i32 = arith.constant 0 : i32
    %c0_i32_0 = arith.constant 0 : i32
    %c0_i32_1 = arith.constant 0 : i32
    return %c0_i32, %c0_i32_0 : i32, i32
  }
  func.func @transform_3(%arg0: i32) -> (i32, i32) {
    %c0_i32 = arith.constant 0 : i32
    %c0_i32_0 = arith.constant 0 : i32
    %c0_i32_1 = arith.constant 0 : i32
    return %c0_i32, %c0_i32_0 : i32, i32
  }
  func.func @transform_4(%arg0: i32) -> (i32, i32) {
    %c0_i32 = arith.constant 0 : i32
    %c0_i32_0 = arith.constant 0 : i32
    %c0_i32_1 = arith.constant 0 : i32
    return %c0_i32, %c0_i32_0 : i32, i32
  }
  func.func @transform_5(%arg0: i32) -> (i32, i32) {
    %c0_i32 = arith.constant 0 : i32
    %c0_i32_0 = arith.constant 0 : i32
    %c0_i32_1 = arith.constant 0 : i32
    return %c0_i32, %c0_i32_0 : i32, i32
  }
  func.func @transform_6(%arg0: i32) -> (i32, i32) {
    %c0_i32 = arith.constant 0 : i32
    %c0_i32_0 = arith.constant 0 : i32
    %c0_i32_1 = arith.constant 0 : i32
    return %c0_i32, %c0_i32_0 : i32, i32
  }
  func.func @transform_7(%arg0: i32) -> (i32, i32) {
    %c0_i32 = arith.constant 0 : i32
    %c0_i32_0 = arith.constant 0 : i32
    %c0_i32_1 = arith.constant 0 : i32
    return %c0_i32, %c0_i32_0 : i32, i32
  }
  func.func @transform_8(%arg0: i32) -> (i32, i32) {
    %c0_i32 = arith.constant 0 : i32
    %c0_i32_0 = arith.constant 0 : i32
    %c0_i32_1 = arith.constant 0 : i32
    return %c0_i32, %c0_i32_0 : i32, i32
  }
  func.func @transform_9(%arg0: i32) -> (i32, i32) {
    %c0_i32 = arith.constant 0 : i32
    %c0_i32_0 = arith.constant 0 : i32
    %c0_i32_1 = arith.constant 0 : i32
    return %c0_i32, %c0_i32_0 : i32, i32
  }
  func.func @transform_10(%arg0: i32) -> (i32, i32) {
    %c0_i32 = arith.constant 0 : i32
    %c0_i32_0 = arith.constant 0 : i32
    %c0_i32_1 = arith.constant 0 : i32
    return %c0_i32, %c0_i32_0 : i32, i32
  }
  func.func @transform_11(%arg0: i32) -> (i32, i32) {
    %c0_i32 = arith.constant 0 : i32
    %c0_i32_0 = arith.constant 0 : i32
    %c0_i32_1 = arith.constant 0 : i32
    return %c0_i32, %c0_i32_0 : i32, i32
  }
  func.func @transform_12(%arg0: i32) -> (i32, i32) {
    %c0_i32 = arith.constant 0 : i32
    %c0_i32_0 = arith.constant 0 : i32
    %c0_i32_1 = arith.constant 0 : i32
    return %c0_i32, %c0_i32_0 : i32, i32
  }
  func.func @transform_13(%arg0: i32) -> (i32, i32) {
    %c0_i32 = arith.constant 0 : i32
    %c0_i32_0 = arith.constant 0 : i32
    %c0_i32_1 = arith.constant 0 : i32
    return %c0_i32, %c0_i32_0 : i32, i32
  }
  func.func @transform_14(%arg0: i32) -> (i32, i32, i32) {
    %c0_i32 = arith.constant 0 : i32
    %c0_i32_0 = arith.constant 0 : i32
    %c0_i32_1 = arith.constant 0 : i32
    return %arg0, %c0_i32, %c0_i32_0 : i32, i32, i32
  }
}

</mosaic_0001>

<llo_original>
// kernel: tpu_custom_call.1
$region0: #{tpu_custom_call.1}
  #allocation0 [shape = 'u32[]', space=smem, size = 0x4, offset = 0x4, fixed_abs, tag = 'smem constant byte address 0x4 - core index']
  #allocation1 [shape = 'u32[144,128]{1,0:T(1,128)}', space=vmem, size = 0x12000, scoped, tag = 'internal scratch']
  %s0 = inlined_call_operand.hbm [shape: f32[2,8,128], index: 0, kind: input, shape index: {}]
  %s1 = inlined_call_operand.hbm [shape: f32[4,1,128], index: 1, kind: input, shape index: {}]
  %s2 = inlined_call_operand.vmem [shape: f32[1,128], index: 2, kind: input, shape index: {}]
  %s3 = inlined_call_operand.vmem [shape: f32[1,128], index: 3, kind: input, shape index: {}]
  %s4 = inlined_call_operand.hbm [shape: bf16[128,384], index: 4, kind: input, shape index: {}]
  %s5 = inlined_call_operand.vmem [shape: f32[1,384], index: 5, kind: input, shape index: {}]
  %s6 = inlined_call_operand.hbm [shape: bf16[128,128], index: 6, kind: input, shape index: {}]
  %s7 = inlined_call_operand.vmem [shape: f32[1,128], index: 7, kind: input, shape index: {}]
  %s8 = inlined_call_operand.vmem [shape: f32[1,128], index: 8, kind: input, shape index: {}]
  %s9 = inlined_call_operand.vmem [shape: f32[1,128], index: 9, kind: input, shape index: {}]
  %s10 = inlined_call_operand.hbm [shape: bf16[128,128], index: 10, kind: input, shape index: {}]
  %s11 = inlined_call_operand.vmem [shape: f32[1,128], index: 11, kind: input, shape index: {}]
  %s12 = inlined_call_operand.hbm [shape: bf16[128,128], index: 12, kind: input, shape index: {}]
  %s13 = inlined_call_operand.vmem [shape: f32[1,128], index: 13, kind: input, shape index: {}]
  %s14 = inlined_call_operand.hbm [shape: f32[2,8,128], index: 14, kind: output, shape index: {}]
  %s15 = sld [smem:[#allocation0]]
  $region113: #{tpu_custom_call.1} parent=0
    _
  %s17 = ssub.s32 1, %s15
  %s18 = scalar_select 0, %s17, %s15
  $region1: #{tpu_custom_call.1} parent=0
    #allocation2 [shape = 'u8[8192]{0}', space=vmem, size = 0x2000, scoped, tag = 'input window, operand 0']
    #allocation3 [shape = 's32[2]{0}', space=sflag, size = 0x8, scoped, tag = 'scoped memory for tpu_custom_call.1']
    #allocation4 [shape = 's32[2]{0}', space=sflag, size = 0x8, scoped, tag = 'scoped memory for tpu_custom_call.1']
    #allocation5 [shape = 'u8[2048]{0}', space=vmem, size = 0x800, scoped, tag = 'input window, operand 1, single buffered']
    #allocation6 [shape = 's32[1]{0}', space=sflag, size = 0x4, scoped, tag = 'scoped memory for tpu_custom_call.1']
    #allocation7 [shape = 'u8[98304]{0}', space=vmem, size = 0x18000, scoped, tag = 'input window, operand 4, single buffered']
    #allocation8 [shape = 'u8[32768]{0}', space=vmem, size = 0x8000, scoped, tag = 'input window, operand 6, single buffered']
    #allocation9 [shape = 's32[1]{0}', space=sflag, size = 0x4, scoped, tag = 'scoped memory for tpu_custom_call.1']
    #allocation10 [shape = 'u8[32768]{0}', space=vmem, size = 0x8000, scoped, tag = 'input window, operand 10, single buffered']
    #allocation11 [shape = 'u8[32768]{0}', space=vmem, size = 0x8000, scoped, tag = 'input window, operand 12, single buffered']
    #allocation12 [shape = 's32[1]{0}', space=sflag, size = 0x4, scoped, tag = 'scoped memory for tpu_custom_call.1']
    #allocation13 [shape = 'u8[8192]{0}', space=vmem, size = 0x2000, scoped, tag = 'output window, operand 0']
    %19 = vsyncpa [#allocation3], 0
    %s20 = scalar_lea.sflag [#allocation3], 1
    %21 = vsyncpa %s20, 0
    %22 = vsyncpa [#allocation6], 0
    %23 = vsyncpa [#allocation9], 0
    %24 = vsyncpa [#allocation12], 0
    %25 = vsyncpa [#allocation4], 0
    %s26 = scalar_lea.sflag [#allocation4], 1
    %27 = vsyncpa %s26, 0
    loop: start=0, step=1, limit=4
    $region2: #{tpu_custom_call.1} parent=1 // loop_pre_header
      _
    $region3: #{tpu_custom_call.1} parent=1 // loop_header
      %s29 = sphi 0, %s33
      %p30 = scmp.ge.s32.totalorder %s29, 4
      %s39 = sphi 0, %s41
      %s42 = sphi 0, %s39
      %s43 = sphi 0, %s42
      %s59 = sphi 0, %s43
      %s63 = sphi 0, %s63
      %s65 = sphi 0, %s63
      %s66 = sphi 0, %s65
      %s80 = sphi 0, %s66
      %s84 = sphi 0, %s84
      %s86 = sphi 0, %s84
      %s87 = sphi 0, %s86
      %s101 = sphi 0, %s87
      %s105 = sphi 0, %s105
      %s107 = sphi 0, %s105
      %s108 = sphi 0, %s107
      %s122 = sphi 0, %s108
      %s126 = sphi 0, %s126
      %s128 = sphi 0, %s126
      %s129 = sphi 0, %s128
      %s143 = sphi 0, %s129
      %s147 = sphi 0, %s147
      %s149 = sphi 0, %s147
      %s150 = sphi 0, %s149
      %s164 = sphi 0, %s150
      %s168 = sphi 0, %s168
      %s170 = sphi 0, %s168
      %s171 = sphi 0, %s170
      %s185 = sphi 0, %s171
      %s189 = sphi 0, %s189
      %s191 = sphi 0, %s189
      %s192 = sphi 0, %s191
      %s206 = sphi 0, %s192
      %s210 = sphi 0, %s210
      %s212 = sphi 0, %s210
      %s213 = sphi 0, %s212
      %s227 = sphi 0, %s213
      %s231 = sphi 0, %s231
      %s233 = sphi 0, %s231
      %s234 = sphi 0, %s233
      %s248 = sphi 0, %s234
      %s252 = sphi 0, %s252
      %s254 = sphi 0, %s252
      %s255 = sphi 0, %s254
      %s269 = sphi 0, %s255
      %s273 = sphi 0, %s273
      %s275 = sphi 0, %s273
      %s276 = sphi 0, %s275
      %s290 = sphi 0, %s276
      %s294 = sphi 0, %s294
      %s296 = sphi 0, %s294
      %s297 = sphi 0, %s296
      %s311 = sphi 0, %s297
      %s315 = sphi 0, %s315
      %s317 = sphi 0, %s315
      %s318 = sphi 0, %s317
      %s332 = sphi 0, %s318
      %s338 = sphi 0, %s340
      %s341 = sphi 0, %s338
      %s342 = sphi 0, %s341
      %s358 = sphi 0, %s342
    $region4: #{tpu_custom_call.1} parent=1 // loop_header_branch
      %32 = sbr.rel (%p30) target = $region8
    $region5: #{tpu_custom_call.1} parent=1 // loop_body
      %s34 = ssub.s32 %s29, 1
      %s35 = ssub.s32 %s29, 2
      %s36 = sadd.s32 %s29, 1
      %s37 = ssub.s32 %s29, %s36
      %p38 = scmp.eq.s32.totalorder %s37, 0
      %s40 = sadd.s32 %s39, 1
      %s41 = scalar_select %p38, %s39, %s40
      %p44 = pneg %p38
      %p45 = scmp.eq.s32.totalorder %s29, 1
      %p46 = por %p44, %p45
      %p47 = scmp.ne.s32.totalorder %s39, %s42
      %p48 = scmp.eq.s32.totalorder %s29, 0
      %p49 = por %p47, %p48
      %p50 = scmp.ne.s32.totalorder %s39, %s42
      %p51 = scmp.eq.s32.totalorder %s34, 1
      %p52 = por %p50, %p51
      %p53 = scmp.ne.s32.totalorder %s42, %s43
      %p54 = scmp.eq.s32.totalorder %s34, 0
      %p55 = por %p53, %p54
      %p56 = scmp.ne.s32.totalorder %s42, %s43
      %p57 = scmp.eq.s32.totalorder %s35, 1
      %p58 = por %p56, %p57
      %p60 = scmp.ne.s32.totalorder %s43, %s59
      %p61 = scmp.eq.s32.totalorder %s35, 0
      %p62 = por %p60, %p61
      %s64 = sadd.s32 %s63, 1
      %p67 = scmp.eq.s32.totalorder %s29, 1
      %p68 = scmp.ne.s32.totalorder %s63, %s65
      %p69 = scmp.eq.s32.totalorder %s29, 0
      %p70 = por %p68, %p69
      %p71 = scmp.ne.s32.totalorder %s63, %s65
      %p72 = scmp.eq.s32.totalorder %s34, 1
      %p73 = por %p71, %p72
      %p74 = scmp.ne.s32.totalorder %s65, %s66
      %p75 = scmp.eq.s32.totalorder %s34, 0
      %p76 = por %p74, %p75
      %p77 = scmp.ne.s32.totalorder %s65, %s66
      %p78 = scmp.eq.s32.totalorder %s35, 1
      %p79 = por %p77, %p78
      %p81 = scmp.ne.s32.totalorder %s66, %s80
      %p82 = scmp.eq.s32.totalorder %s35, 0
      %p83 = por %p81, %p82
      %s85 = sadd.s32 %s84, 1
      %p88 = scmp.eq.s32.totalorder %s29, 1
      %p89 = scmp.ne.s32.totalorder %s84, %s86
      %p90 = scmp.eq.s32.totalorder %s29, 0
      %p91 = por %p89, %p90
      %p92 = scmp.ne.s32.totalorder %s84, %s86
      %p93 = scmp.eq.s32.totalorder %s34, 1
      %p94 = por %p92, %p93
      %p95 = scmp.ne.s32.totalorder %s86, %s87
      %p96 = scmp.eq.s32.totalorder %s34, 0
      %p97 = por %p95, %p96
      %p98 = scmp.ne.s32.totalorder %s86, %s87
      %p99 = scmp.eq.s32.totalorder %s35, 1
      %p100 = por %p98, %p99
      %p102 = scmp.ne.s32.totalorder %s87, %s101
      %p103 = scmp.eq.s32.totalorder %s35, 0
      %p104 = por %p102, %p103
      %s106 = sadd.s32 %s105, 1
      %p109 = scmp.eq.s32.totalorder %s29, 1
      %p110 = scmp.ne.s32.totalorder %s105, %s107
      %p111 = scmp.eq.s32.totalorder %s29, 0
      %p112 = por %p110, %p111
      %p113 = scmp.ne.s32.totalorder %s105, %s107
      %p114 = scmp.eq.s32.totalorder %s34, 1
      %p115 = por %p113, %p114
      %p116 = scmp.ne.s32.totalorder %s107, %s108
      %p117 = scmp.eq.s32.totalorder %s34, 0
      %p118 = por %p116, %p117
      %p119 = scmp.ne.s32.totalorder %s107, %s108
      %p120 = scmp.eq.s32.totalorder %s35, 1
      %p121 = por %p119, %p120
      %p123 = scmp.ne.s32.totalorder %s108, %s122
      %p124 = scmp.eq.s32.totalorder %s35, 0
      %p125 = por %p123, %p124
      %s127 = sadd.s32 %s126, 1
      %p130 = scmp.eq.s32.totalorder %s29, 1
      %p131 = scmp.ne.s32.totalorder %s126, %s128
      %p132 = scmp.eq.s32.totalorder %s29, 0
      %p133 = por %p131, %p132
      %p134 = scmp.ne.s32.totalorder %s126, %s128
      %p135 = scmp.eq.s32.totalorder %s34, 1
      %p136 = por %p134, %p135
      %p137 = scmp.ne.s32.totalorder %s128, %s129
      %p138 = scmp.eq.s32.totalorder %s34, 0
      %p139 = por %p137, %p138
      %p140 = scmp.ne.s32.totalorder %s128, %s129
      %p141 = scmp.eq.s32.totalorder %s35, 1
      %p142 = por %p140, %p141
      %p144 = scmp.ne.s32.totalorder %s129, %s143
      %p145 = scmp.eq.s32.totalorder %s35, 0
      %p146 = por %p144, %p145
      %s148 = sadd.s32 %s147, 1
      %p151 = scmp.eq.s32.totalorder %s29, 1
      %p152 = scmp.ne.s32.totalorder %s147, %s149
      %p153 = scmp.eq.s32.totalorder %s29, 0
      %p154 = por %p152, %p153
      %p155 = scmp.ne.s32.totalorder %s147, %s149
      %p156 = scmp.eq.s32.totalorder %s34, 1
      %p157 = por %p155, %p156
      %p158 = scmp.ne.s32.totalorder %s149, %s150
      %p159 = scmp.eq.s32.totalorder %s34, 0
      %p160 = por %p158, %p159
      %p161 = scmp.ne.s32.totalorder %s149, %s150
      %p162 = scmp.eq.s32.totalorder %s35, 1
      %p163 = por %p161, %p162
      %p165 = scmp.ne.s32.totalorder %s150, %s164
      %p166 = scmp.eq.s32.totalorder %s35, 0
      %p167 = por %p165, %p166
      %s169 = sadd.s32 %s168, 1
      %p172 = scmp.eq.s32.totalorder %s29, 1
      %p173 = scmp.ne.s32.totalorder %s168, %s170
      %p174 = scmp.eq.s32.totalorder %s29, 0
      %p175 = por %p173, %p174
      %p176 = scmp.ne.s32.totalorder %s168, %s170
      %p177 = scmp.eq.s32.totalorder %s34, 1
      %p178 = por %p176, %p177
      %p179 = scmp.ne.s32.totalorder %s170, %s171
      %p180 = scmp.eq.s32.totalorder %s34, 0
      %p181 = por %p179, %p180
      %p182 = scmp.ne.s32.totalorder %s170, %s171
      %p183 = scmp.eq.s32.totalorder %s35, 1
      %p184 = por %p182, %p183
      %p186 = scmp.ne.s32.totalorder %s171, %s185
      %p187 = scmp.eq.s32.totalorder %s35, 0
      %p188 = por %p186, %p187
      %s190 = sadd.s32 %s189, 1
      %p193 = scmp.eq.s32.totalorder %s29, 1
      %p194 = scmp.ne.s32.totalorder %s189, %s191
      %p195 = scmp.eq.s32.totalorder %s29, 0
      %p196 = por %p194, %p195
      %p197 = scmp.ne.s32.totalorder %s189, %s191
      %p198 = scmp.eq.s32.totalorder %s34, 1
      %p199 = por %p197, %p198
      %p200 = scmp.ne.s32.totalorder %s191, %s192
      %p201 = scmp.eq.s32.totalorder %s34, 0
      %p202 = por %p200, %p201
      %p203 = scmp.ne.s32.totalorder %s191, %s192
      %p204 = scmp.eq.s32.totalorder %s35, 1
      %p205 = por %p203, %p204
      %p207 = scmp.ne.s32.totalorder %s192, %s206
      %p208 = scmp.eq.s32.totalorder %s35, 0
      %p209 = por %p207, %p208
      %s211 = sadd.s32 %s210, 1
      %p214 = scmp.eq.s32.totalorder %s29, 1
      %p215 = scmp.ne.s32.totalorder %s210, %s212
      %p216 = scmp.eq.s32.totalorder %s29, 0
      %p217 = por %p215, %p216
      %p218 = scmp.ne.s32.totalorder %s210, %s212
      %p219 = scmp.eq.s32.totalorder %s34, 1
      %p220 = por %p218, %p219
      %p221 = scmp.ne.s32.totalorder %s212, %s213
      %p222 = scmp.eq.s32.totalorder %s34, 0
      %p223 = por %p221, %p222
      %p224 = scmp.ne.s32.totalorder %s212, %s213
      %p225 = scmp.eq.s32.totalorder %s35, 1
      %p226 = por %p224, %p225
      %p228 = scmp.ne.s32.totalorder %s213, %s227
      %p229 = scmp.eq.s32.totalorder %s35, 0
      %p230 = por %p228, %p229
      %s232 = sadd.s32 %s231, 1
      %p235 = scmp.eq.s32.totalorder %s29, 1
      %p236 = scmp.ne.s32.totalorder %s231, %s233
      %p237 = scmp.eq.s32.totalorder %s29, 0
      %p238 = por %p236, %p237
      %p239 = scmp.ne.s32.totalorder %s231, %s233
      %p240 = scmp.eq.s32.totalorder %s34, 1
      %p241 = por %p239, %p240
      %p242 = scmp.ne.s32.totalorder %s233, %s234
      %p243 = scmp.eq.s32.totalorder %s34, 0
      %p244 = por %p242, %p243
      %p245 = scmp.ne.s32.totalorder %s233, %s234
      %p246 = scmp.eq.s32.totalorder %s35, 1
      %p247 = por %p245, %p246
      %p249 = scmp.ne.s32.totalorder %s234, %s248
      %p250 = scmp.eq.s32.totalorder %s35, 0
      %p251 = por %p249, %p250
      %s253 = sadd.s32 %s252, 1
      %p256 = scmp.eq.s32.totalorder %s29, 1
      %p257 = scmp.ne.s32.totalorder %s252, %s254
      %p258 = scmp.eq.s32.totalorder %s29, 0
      %p259 = por %p257, %p258
      %p260 = scmp.ne.s32.totalorder %s252, %s254
      %p261 = scmp.eq.s32.totalorder %s34, 1
      %p262 = por %p260, %p261
      %p263 = scmp.ne.s32.totalorder %s254, %s255
      %p264 = scmp.eq.s32.totalorder %s34, 0
      %p265 = por %p263, %p264
      %p266 = scmp.ne.s32.totalorder %s254, %s255
      %p267 = scmp.eq.s32.totalorder %s35, 1
      %p268 = por %p266, %p267
      %p270 = scmp.ne.s32.totalorder %s255, %s269
      %p271 = scmp.eq.s32.totalorder %s35, 0
      %p272 = por %p270, %p271
      %s274 = sadd.s32 %s273, 1
      %p277 = scmp.eq.s32.totalorder %s29, 1
      %p278 = scmp.ne.s32.totalorder %s273, %s275
      %p279 = scmp.eq.s32.totalorder %s29, 0
      %p280 = por %p278, %p279
      %p281 = scmp.ne.s32.totalorder %s273, %s275
      %p282 = scmp.eq.s32.totalorder %s34, 1
      %p283 = por %p281, %p282
      %p284 = scmp.ne.s32.totalorder %s275, %s276
      %p285 = scmp.eq.s32.totalorder %s34, 0
      %p286 = por %p284, %p285
      %p287 = scmp.ne.s32.totalorder %s275, %s276
      %p288 = scmp.eq.s32.totalorder %s35, 1
      %p289 = por %p287, %p288
      %p291 = scmp.ne.s32.totalorder %s276, %s290
      %p292 = scmp.eq.s32.totalorder %s35, 0
      %p293 = por %p291, %p292
      %s295 = sadd.s32 %s294, 1
      %p298 = scmp.eq.s32.totalorder %s29, 1
      %p299 = scmp.ne.s32.totalorder %s294, %s296
      %p300 = scmp.eq.s32.totalorder %s29, 0
      %p301 = por %p299, %p300
      %p302 = scmp.ne.s32.totalorder %s294, %s296
      %p303 = scmp.eq.s32.totalorder %s34, 1
      %p304 = por %p302, %p303
      %p305 = scmp.ne.s32.totalorder %s296, %s297
      %p306 = scmp.eq.s32.totalorder %s34, 0
      %p307 = por %p305, %p306
      %p308 = scmp.ne.s32.totalorder %s296, %s297
      %p309 = scmp.eq.s32.totalorder %s35, 1
      %p310 = por %p308, %p309
      %p312 = scmp.ne.s32.totalorder %s297, %s311
      %p313 = scmp.eq.s32.totalorder %s35, 0
      %p314 = por %p312, %p313
      %s316 = sadd.s32 %s315, 1
      %p319 = scmp.eq.s32.totalorder %s29, 1
      %p320 = scmp.ne.s32.totalorder %s315, %s317
      %p321 = scmp.eq.s32.totalorder %s29, 0
      %p322 = por %p320, %p321
      %p323 = scmp.ne.s32.totalorder %s315, %s317
      %p324 = scmp.eq.s32.totalorder %s34, 1
      %p325 = por %p323, %p324
      %p326 = scmp.ne.s32.totalorder %s317, %s318
      %p327 = scmp.eq.s32.totalorder %s34, 0
      %p328 = por %p326, %p327
      %p329 = scmp.ne.s32.totalorder %s317, %s318
      %p330 = scmp.eq.s32.totalorder %s35, 1
      %p331 = por %p329, %p330
      %p333 = scmp.ne.s32.totalorder %s318, %s332
      %p334 = scmp.eq.s32.totalorder %s35, 0
      %p335 = por %p333, %p334
      %s336 = ssub.s32 %s29, %s36
      %p337 = scmp.eq.s32.totalorder %s336, 0
      %s339 = sadd.s32 %s338, 1
      %s340 = scalar_select %p337, %s338, %s339
      %p343 = pneg %p337
      %p344 = scmp.eq.s32.totalorder %s29, 1
      %p345 = por %p343, %p344
      %p346 = scmp.ne.s32.totalorder %s338, %s341
      %p347 = scmp.eq.s32.totalorder %s29, 0
      %p348 = por %p346, %p347
      %p349 = scmp.ne.s32.totalorder %s338, %s341
      %p350 = scmp.eq.s32.totalorder %s34, 1
      %p351 = por %p349, %p350
      %p352 = scmp.ne.s32.totalorder %s341, %s342
      %p353 = scmp.eq.s32.totalorder %s34, 0
      %p354 = por %p352, %p353
      %p355 = scmp.ne.s32.totalorder %s341, %s342
      %p356 = scmp.eq.s32.totalorder %s35, 1
      %p357 = por %p355, %p356
      %p359 = scmp.ne.s32.totalorder %s342, %s358
      %p360 = scmp.eq.s32.totalorder %s35, 0
      %p361 = por %p359, %p360
      %p362 = scmp.le.s32.totalorder 1, %s29
      %p363 = scmp.lt.s32.totalorder %s29, 3
      %p364 = pnand %p362, %p363
      %p365 = pneg %p364
      // Predicated region
      $region9: #{tpu_custom_call.1} parent=5 // pred_check
        _
      $region10: #{tpu_custom_call.1} parent=5 // pred_check_branch
        %367 = sbr.rel (%p364) target = $region12
      $region11: #{tpu_custom_call.1} parent=5 // pred_region
        %s368 = ssub.s32 %s29, 1
        // Predicated region
        $region13: #{tpu_custom_call.1} parent=11 // pred_check
          %p369 = pneg %p76
        $region14: #{tpu_custom_call.1} parent=11 // pred_check_branch
          %371 = sbr.rel (%p369) target = $region16
        $region15: #{tpu_custom_call.1} parent=11 // pred_region
          %s373 = ssub.s32 64, 64
          %374 = vsyncadd [#allocation6], %s373
          %s375 = sshll.u32 [#allocation5], 4
          %s376 = int_to_ptr.vmem [resolvable:$true] %s375
          %381 = dma.hbm_to_vmem [thread:$0]  %s1, 64, %s376, [#allocation6], 16, 16, 1
        $region16: #{tpu_custom_call.1} parent=11 // pred_fallthru
          _
        // Predicated region
        $region17: #{tpu_custom_call.1} parent=11 // pred_check
          %p382 = pneg %p97
        $region18: #{tpu_custom_call.1} parent=11 // pred_check_branch
          %384 = sbr.rel (%p382) target = $region20
        $region19: #{tpu_custom_call.1} parent=11 // pred_region
          _
        $region20: #{tpu_custom_call.1} parent=11 // pred_fallthru
          _
        // Predicated region
        $region21: #{tpu_custom_call.1} parent=11 // pred_check
          %p385 = pneg %p118
        $region22: #{tpu_custom_call.1} parent=11 // pred_check_branch
          %387 = sbr.rel (%p385) target = $region24
        $region23: #{tpu_custom_call.1} parent=11 // pred_region
          _
        $region24: #{tpu_custom_call.1} parent=11 // pred_fallthru
          _
        // Predicated region
        $region25: #{tpu_custom_call.1} parent=11 // pred_check
          %p388 = pneg %p139
        $region26: #{tpu_custom_call.1} parent=11 // pred_check_branch
          %390 = sbr.rel (%p388) target = $region28
        $region27: #{tpu_custom_call.1} parent=11 // pred_region
          %s392 = ssub.s32 3072, 3072
          %393 = vsyncadd [#allocation6], %s392
          %s394 = sshll.u32 [#allocation7], 4
          %s395 = int_to_ptr.vmem [resolvable:$true] %s394
          %400 = dma.hbm_to_vmem [thread:$0]  %s4, 3072, %s395, [#allocation6], 192, 192, 12
        $region28: #{tpu_custom_call.1} parent=11 // pred_fallthru
          _
        // Predicated region
        $region29: #{tpu_custom_call.1} parent=11 // pred_check
          %p401 = pneg %p160
        $region30: #{tpu_custom_call.1} parent=11 // pred_check_branch
          %403 = sbr.rel (%p401) target = $region32
        $region31: #{tpu_custom_call.1} parent=11 // pred_region
          _
        $region32: #{tpu_custom_call.1} parent=11 // pred_fallthru
          _
        // Predicated region
        $region33: #{tpu_custom_call.1} parent=11 // pred_check
          %p404 = pneg %p181
        $region34: #{tpu_custom_call.1} parent=11 // pred_check_branch
          %406 = sbr.rel (%p404) target = $region36
        $region35: #{tpu_custom_call.1} parent=11 // pred_region
          %s408 = ssub.s32 1024, 1024
          %409 = vsyncadd [#allocation9], %s408
          %s410 = sshll.u32 [#allocation8], 4
          %s411 = int_to_ptr.vmem [resolvable:$true] %s410
          %416 = dma.hbm_to_vmem [thread:$0]  %s6, 1024, %s411, [#allocation9], 64, 64, 4
        $region36: #{tpu_custom_call.1} parent=11 // pred_fallthru
          _
        // Predicated region
        $region37: #{tpu_custom_call.1} parent=11 // pred_check
          %p417 = pneg %p202
        $region38: #{tpu_custom_call.1} parent=11 // pred_check_branch
          %419 = sbr.rel (%p417) target = $region40
        $region39: #{tpu_custom_call.1} parent=11 // pred_region
          _
        $region40: #{tpu_custom_call.1} parent=11 // pred_fallthru
          _
        // Predicated region
        $region41: #{tpu_custom_call.1} parent=11 // pred_check
          %p420 = pneg %p223
        $region42: #{tpu_custom_call.1} parent=11 // pred_check_branch
          %422 = sbr.rel (%p420) target = $region44
        $region43: #{tpu_custom_call.1} parent=11 // pred_region
          _
        $region44: #{tpu_custom_call.1} parent=11 // pred_fallthru
          _
        // Predicated region
        $region45: #{tpu_custom_call.1} parent=11 // pred_check
          %p423 = pneg %p244
        $region46: #{tpu_custom_call.1} parent=11 // pred_check_branch
          %425 = sbr.rel (%p423) target = $region48
        $region47: #{tpu_custom_call.1} parent=11 // pred_region
          _
        $region48: #{tpu_custom_call.1} parent=11 // pred_fallthru
          _
        // Predicated region
        $region49: #{tpu_custom_call.1} parent=11 // pred_check
          %p426 = pneg %p265
        $region50: #{tpu_custom_call.1} parent=11 // pred_check_branch
          %428 = sbr.rel (%p426) target = $region52
        $region51: #{tpu_custom_call.1} parent=11 // pred_region
          %s430 = ssub.s32 1024, 1024
          %431 = vsyncadd [#allocation9], %s430
          %s432 = sshll.u32 [#allocation10], 4
          %s433 = int_to_ptr.vmem [resolvable:$true] %s432
          %438 = dma.hbm_to_vmem [thread:$0]  %s10, 1024, %s433, [#allocation9], 64, 64, 4
        $region52: #{tpu_custom_call.1} parent=11 // pred_fallthru
          _
        // Predicated region
        $region53: #{tpu_custom_call.1} parent=11 // pred_check
          %p439 = pneg %p286
        $region54: #{tpu_custom_call.1} parent=11 // pred_check_branch
          %441 = sbr.rel (%p439) target = $region56
        $region55: #{tpu_custom_call.1} parent=11 // pred_region
          _
        $region56: #{tpu_custom_call.1} parent=11 // pred_fallthru
          _
        // Predicated region
        $region57: #{tpu_custom_call.1} parent=11 // pred_check
          %p442 = pneg %p307
        $region58: #{tpu_custom_call.1} parent=11 // pred_check_branch
          %444 = sbr.rel (%p442) target = $region60
        $region59: #{tpu_custom_call.1} parent=11 // pred_region
          %s446 = ssub.s32 1024, 1024
          %447 = vsyncadd [#allocation12], %s446
          %s448 = sshll.u32 [#allocation11], 4
          %s449 = int_to_ptr.vmem [resolvable:$true] %s448
          %454 = dma.hbm_to_vmem [thread:$0]  %s12, 1024, %s449, [#allocation12], 64, 64, 4
        $region60: #{tpu_custom_call.1} parent=11 // pred_fallthru
          _
        // Predicated region
        $region61: #{tpu_custom_call.1} parent=11 // pred_check
          %p455 = pneg %p328
        $region62: #{tpu_custom_call.1} parent=11 // pred_check_branch
          %457 = sbr.rel (%p455) target = $region64
        $region63: #{tpu_custom_call.1} parent=11 // pred_region
          _
        $region64: #{tpu_custom_call.1} parent=11 // pred_fallthru
          _
      $region12: #{tpu_custom_call.1} parent=5 // pred_fallthru
        _
      %p458 = scmp.lt.s32.totalorder %s29, 2
      // Predicated region
      $region65: #{tpu_custom_call.1} parent=5 // pred_check
        %p459 = pneg %p458
      $region66: #{tpu_custom_call.1} parent=5 // pred_check_branch
        %461 = sbr.rel (%p459) target = $region68
      $region67: #{tpu_custom_call.1} parent=5 // pred_region
        // Predicated region
        $region69: #{tpu_custom_call.1} parent=67 // pred_check
          %p462 = pneg %p49
        $region70: #{tpu_custom_call.1} parent=67 // pred_check_branch
          %464 = sbr.rel (%p462) target = $region72
        $region71: #{tpu_custom_call.1} parent=67 // pred_region
          %s465 = sand.u32 %s39, 1
          %s466 = scalar_lea.sflag [#allocation3], %s465
          %s467 = sand.u32 %s39, 1
          %s468 = smul.addr %s467, 8
          %s469 = scalar_lea.vmem [#allocation2], %s468
          %s471 = ssub.s32 128, 128
          %472 = vsyncadd %s466, %s471
          %s473 = smul.addr %s29, 128
          %s474 = scalar_lea.hbm %s0, %s473
          %s476 = sshll.u32 %s469, 4
          %s477 = int_to_ptr.vmem [resolvable:$true] %s476
          %479 = dma.hbm_to_vmem [thread:$0]  %s474, 128, %s477, %s466
        $region72: #{tpu_custom_call.1} parent=67 // pred_fallthru
          _
      $region68: #{tpu_custom_call.1} parent=5 // pred_fallthru
        _
      %p480 = scmp.le.s32.totalorder 1, %s29
      %p481 = scmp.lt.s32.totalorder %s29, 3
      %p482 = pnand %p480, %p481
      %p483 = pneg %p482
      // Predicated region
      $region73: #{tpu_custom_call.1} parent=5 // pred_check
        _
      $region74: #{tpu_custom_call.1} parent=5 // pred_check_branch
        %485 = sbr.rel (%p482) target = $region76
      $region75: #{tpu_custom_call.1} parent=5 // pred_region
        %s486 = ssub.s32 %s29, 1
        %s487 = sand.u32 %s42, 1
        %s488 = scalar_lea.sflag [#allocation3], %s487
        %s489 = sand.u32 %s42, 1
        %s490 = smul.addr %s489, 8
        %s491 = scalar_lea.vmem [#allocation2], %s490
        // Predicated region
        $region77: #{tpu_custom_call.1} parent=75 // pred_check
          %p492 = pneg %p55
        $region78: #{tpu_custom_call.1} parent=75 // pred_check_branch
          %494 = sbr.rel (%p492) target = $region80
        $region79: #{tpu_custom_call.1} parent=75 // pred_region
          %495 = dma.done %s488, 128
        $region80: #{tpu_custom_call.1} parent=75 // pred_fallthru
          _
        // Predicated region
        $region81: #{tpu_custom_call.1} parent=75 // pred_check
          %p496 = pneg %p76
        $region82: #{tpu_custom_call.1} parent=75 // pred_check_branch
          %498 = sbr.rel (%p496) target = $region84
        $region83: #{tpu_custom_call.1} parent=75 // pred_region
          %499 = dma.done [#allocation6], 64
        $region84: #{tpu_custom_call.1} parent=75 // pred_fallthru
          _
        // Predicated region
        $region85: #{tpu_custom_call.1} parent=75 // pred_check
          %p500 = pneg %p139
        $region86: #{tpu_custom_call.1} parent=75 // pred_check_branch
          %502 = sbr.rel (%p500) target = $region88
        $region87: #{tpu_custom_call.1} parent=75 // pred_region
          %503 = dma.done [#allocation6], 3072
        $region88: #{tpu_custom_call.1} parent=75 // pred_fallthru
          _
        // Predicated region
        $region89: #{tpu_custom_call.1} parent=75 // pred_check
          %p504 = pneg %p181
        $region90: #{tpu_custom_call.1} parent=75 // pred_check_branch
          %506 = sbr.rel (%p504) target = $region92
        $region91: #{tpu_custom_call.1} parent=75 // pred_region
          %507 = dma.done [#allocation9], 1024
        $region92: #{tpu_custom_call.1} parent=75 // pred_fallthru
          _
        // Predicated region
        $region93: #{tpu_custom_call.1} parent=75 // pred_check
          %p508 = pneg %p265
        $region94: #{tpu_custom_call.1} parent=75 // pred_check_branch
          %510 = sbr.rel (%p508) target = $region96
        $region95: #{tpu_custom_call.1} parent=75 // pred_region
          %511 = dma.done [#allocation9], 1024
        $region96: #{tpu_custom_call.1} parent=75 // pred_fallthru
          _
        // Predicated region
        $region97: #{tpu_custom_call.1} parent=75 // pred_check
          %p512 = pneg %p307
        $region98: #{tpu_custom_call.1} parent=75 // pred_check_branch
          %514 = sbr.rel (%p512) target = $region100
        $region99: #{tpu_custom_call.1} parent=75 // pred_region
          %515 = dma.done [#allocation12], 1024
        $region100: #{tpu_custom_call.1} parent=75 // pred_fallthru
          _
        %s516 = sand.u32 %s42, 1
        %s517 = scalar_lea.sflag [#allocation3], %s516
        %s518 = sand.u32 %s42, 1
        %s519 = smul.addr %s518, 8
        %s520 = scalar_lea.vmem [#allocation2], %s519
        %p521 = pneg %p55
        %p522 = pneg %p52
        %p523 = pneg %p76
        %p524 = pneg %p73
        %p525 = pneg %p97
        %p526 = pneg %p94
        %p527 = pneg %p118
        %p528 = pneg %p115
        %p529 = pneg %p139
        %p530 = pneg %p136
        %p531 = pneg %p160
        %p532 = pneg %p157
        %p533 = pneg %p181
        %p534 = pneg %p178
        %p535 = pneg %p202
        %p536 = pneg %p199
        %p537 = pneg %p223
        %p538 = pneg %p220
        %p539 = pneg %p244
        %p540 = pneg %p241
        %p541 = pneg %p265
        %p542 = pneg %p262
        %p543 = pneg %p286
        %p544 = pneg %p283
        %p545 = pneg %p307
        %p546 = pneg %p304
        %p547 = pneg %p328
        %p548 = pneg %p325
        %p549 = pneg %p354
        %p550 = pneg %p351
        %s551 = sand.u32 %s341, 1
        %s552 = scalar_lea.sflag [#allocation4], %s551
        %s553 = sand.u32 %s341, 1
        %s554 = smul.addr %s553, 8
        %s555 = scalar_lea.vmem [#allocation13], %s554
        %v557 = vld [vmem:[%s491] sm:$0xff]
        %v558 = vlaneseq
        %v559 = vand.u32 %v558, 127
        %vm560 = vcmp.lt.s32.totalorder %v559, 32
        %v561 = vld [vmem:[%s2] sm:$0x1]
        %v562 = vld [vmem:[%s3] sm:$0x1]
        %v563 = vld [vmem:[%s8] sm:$0x1]
        %v564 = vld [vmem:[%s9] sm:$0x1]
        %v565 = vld [vmem:[%s5] sm:$0x7]
        %v566 = vld [vmem:[%s7] sm:$0x1]
        %v567 = vld [vmem:[%s11] sm:$0x1]
        %v568 = vld [vmem:[%s13] sm:$0x1]
        %v569 = vld [vmem:[#allocation5] sm:$0x1]
        %v570 = vld [vmem:[#allocation5 + $0x1] sm:$0x1]
        %v571 = vld [vmem:[#allocation5 + $0x2] sm:$0x1]
        %v572 = vld [vmem:[#allocation5 + $0x3] sm:$0x1]
        %573 = vadd.xlane.f32.xlu0 %v557
        %v574 = vpop.xlane.xlu0 %573
        %v575 = vmul.f32 %v574, 0.03125
        %v576 = vsub.f32 %v557, %v575
        %v577 = vsel %vm560, 1, 0
        %vm578 = vcmp.eq.s32.totalorder %v577, 1
        %v579 = vsel %vm578, %v576, 0.0
        %v580 = vmul.f32 %v579, %v579
        %581 = vadd.xlane.f32.xlu0 %v580
        %v582 = vpop.xlane.xlu0 %581
        %v583 = vmul.f32 %v582, 0.03125
        %v584 = vadd.f32 %v583, 1e-05
        %v585 = vrsqrt.pop %v584
        %v586 = vmul.f32 %v579, %v585
        %v588 = vlaneseq
        %v589 = vshrl.u32 %v588, 7
        %v590 = vsub.s32 0, %v589
        %v591 = vrot.slane %v561, %v590
        %v593 = vmul.f32 %v586, %v591
        %v595 = vlaneseq
        %v596 = vshrl.u32 %v595, 7
        %v597 = vsub.s32 0, %v596
        %v598 = vrot.slane %v562, %v597
        %v600 = vadd.f32 %v593, %v598
        %v601 = vpack.c.bf16 %v600, %v600
        %v602 = vld [vmem:[#allocation7] sm:$0xff]
        %v603 = vld [vmem:[#allocation7 + $0x8] sm:$0xf]
        %v604 = vld [vmem:[#allocation7 + $0xc] sm:$0xff]
        %v605 = vld [vmem:[#allocation7 + $0x14] sm:$0xf]
        %v606 = vld [vmem:[#allocation7 + $0x18] sm:$0xff]
        %v607 = vld [vmem:[#allocation7 + $0x20] sm:$0xf]
        %v608 = vld [vmem:[#allocation7 + $0x24] sm:$0xff]
        %v609 = vld [vmem:[#allocation7 + $0x2c] sm:$0xf]
        %v610 = vld [vmem:[#allocation7 + $0x30] sm:$0xff]
        %v611 = vld [vmem:[#allocation7 + $0x38] sm:$0xf]
        %v612 = vld [vmem:[#allocation7 + $0x3c] sm:$0xff]
        %v613 = vld [vmem:[#allocation7 + $0x44] sm:$0xf]
        %v614 = vld [vmem:[#allocation7 + $0x48] sm:$0xff]
        %v615 = vld [vmem:[#allocation7 + $0x50] sm:$0xf]
        %v616 = vld [vmem:[#allocation7 + $0x54] sm:$0xff]
        %v617 = vld [vmem:[#allocation7 + $0x5c] sm:$0xf]
        %v618 = vld [vmem:[#allocation7 + $0x60] sm:$0xff]
        %v619 = vld [vmem:[#allocation7 + $0x68] sm:$0xf]
        %v620 = vld [vmem:[#allocation7 + $0x6c] sm:$0xff]
        %v621 = vld [vmem:[#allocation7 + $0x74] sm:$0xf]
        %v622 = vld [vmem:[#allocation7 + $0x78] sm:$0xff]
        %v623 = vld [vmem:[#allocation7 + $0x80] sm:$0xf]
        %v624 = vld [vmem:[#allocation7 + $0x84] sm:$0xff]
        %v625 = vld [vmem:[#allocation7 + $0x8c] sm:$0xf]
        %v626 = vld [vmem:[#allocation7 + $0x90] sm:$0xff]
        %v627 = vld [vmem:[#allocation7 + $0x98] sm:$0xf]
        %v628 = vld [vmem:[#allocation7 + $0x9c] sm:$0xff]
        %v629 = vld [vmem:[#allocation7 + $0xa4] sm:$0xf]
        %v630 = vld [vmem:[#allocation7 + $0xa8] sm:$0xff]
        %v631 = vld [vmem:[#allocation7 + $0xb0] sm:$0xf]
        %v632 = vld [vmem:[#allocation7 + $0xb4] sm:$0xff]
        %v633 = vld [vmem:[#allocation7 + $0xbc] sm:$0xf]
        %v635 = vlaneseq
        %v636 = vshrl.u32 %v635, 7
        %v637 = vsub.s32 0, %v636
        %v638 = vrot.slane %v565, %v637
        %v639 = vlaneseq
        %v640 = vshrl.u32 %v639, 7
        %v641 = vsub.s32 1, %v640
        %v642 = vrot.slane %v565, %v641
        %v643 = vlaneseq
        %v644 = vshrl.u32 %v643, 7
        %v645 = vsub.s32 2, %v644
        %v646 = vrot.slane %v565, %v645
        %v682 = vunpack.c.l.b16 %v602
        %v683 = vunpack.c.h.b16 %v602
        %v684 = vunpack.c.l.b16 %v603
        %v685 = vunpack.c.l.b16 %v604
        %v686 = vunpack.c.h.b16 %v604
        %v687 = vunpack.c.l.b16 %v605
        %v688 = vunpack.c.l.b16 %v606
        %v689 = vunpack.c.h.b16 %v606
        %v690 = vunpack.c.l.b16 %v607
        %v691 = vunpack.c.l.b16 %v608
        %v692 = vunpack.c.h.b16 %v608
        %v693 = vunpack.c.l.b16 %v609
        %v694 = vunpack.c.l.b16 %v610
        %v695 = vunpack.c.h.b16 %v610
        %v696 = vunpack.c.l.b16 %v611
        %v697 = vunpack.c.l.b16 %v612
        %v698 = vunpack.c.h.b16 %v612
        %v699 = vunpack.c.l.b16 %v613
        %v700 = vunpack.c.l.b16 %v614
        %v701 = vunpack.c.h.b16 %v614
        %v702 = vunpack.c.l.b16 %v615
        %v703 = vunpack.c.l.b16 %v616
        %v704 = vunpack.c.h.b16 %v616
        %v705 = vunpack.c.l.b16 %v617
        %v706 = vunpack.c.l.b16 %v618
        %v707 = vunpack.c.h.b16 %v618
        %v708 = vunpack.c.l.b16 %v619
        %v709 = vunpack.c.l.b16 %v620
        %v710 = vunpack.c.h.b16 %v620
        %v711 = vunpack.c.l.b16 %v621
        %v712 = vunpack.c.l.b16 %v622
        %v713 = vunpack.c.h.b16 %v622
        %v714 = vunpack.c.l.b16 %v623
        %v715 = vunpack.c.l.b16 %v624
        %v716 = vunpack.c.h.b16 %v624
        %v717 = vunpack.c.l.b16 %v625
        %v718 = vunpack.c.l.b16 %v626
        %v719 = vunpack.c.h.b16 %v626
        %v720 = vunpack.c.l.b16 %v627
        %v721 = vunpack.c.l.b16 %v628
        %v722 = vunpack.c.h.b16 %v628
        %v723 = vunpack.c.l.b16 %v629
        %v724 = vunpack.c.l.b16 %v630
        %v725 = vunpack.c.h.b16 %v630
        %v726 = vunpack.c.l.b16 %v631
        %v727 = vunpack.c.l.b16 %v632
        %v728 = vunpack.c.h.b16 %v632
        %v729 = vunpack.c.l.b16 %v633
        %v730 = vpack.c.b16 %v685, %v682
        %v731 = vpack.c.b16 %v686, %v683
        %v732 = vpack.c.b16 %v687, %v684
        %v733 = vpack.c.b16 %v691, %v688
        %v734 = vpack.c.b16 %v692, %v689
        %v735 = vpack.c.b16 %v693, %v690
        %v736 = vpack.c.b16 %v697, %v694
        %v737 = vpack.c.b16 %v698, %v695
        %v738 = vpack.c.b16 %v699, %v696
        %v739 = vpack.c.b16 %v703, %v700
        %v740 = vpack.c.b16 %v704, %v701
        %v741 = vpack.c.b16 %v705, %v702
        %v742 = vpack.c.b16 %v709, %v706
        %v743 = vpack.c.b16 %v710, %v707
        %v744 = vpack.c.b16 %v711, %v708
        %v745 = vpack.c.b16 %v715, %v712
        %v746 = vpack.c.b16 %v716, %v713
        %v747 = vpack.c.b16 %v717, %v714
        %v748 = vpack.c.b16 %v721, %v718
        %v749 = vpack.c.b16 %v722, %v719
        %v750 = vpack.c.b16 %v723, %v720
        %v751 = vpack.c.b16 %v727, %v724
        %v752 = vpack.c.b16 %v728, %v725
        %v753 = vpack.c.b16 %v729, %v726
        %778 = vmatprep.subr.bf16.mxu0 %v752
        %779 = vmatpush1.bf16.msra.mxu0 %v751
        %780 = vmatprep.subr.bf16.mxu0 %v749
        %781 = vmatpush1.bf16.msra.mxu0 %v748
        %782 = vmatprep.subr.bf16.mxu0 %v746
        %783 = vmatpush1.bf16.msra.mxu0 %v745
        %784 = vmatprep.subr.bf16.mxu0 %v743
        %785 = vmatpush1.bf16.msra.mxu0 %v742
        %786 = vmatprep.subr.bf16.mxu0 %v740
        %787 = vmatpush1.bf16.msra.mxu0 %v739
        %788 = vmatprep.subr.bf16.mxu0 %v737
        %789 = vmatpush1.bf16.msra.mxu0 %v736
        %790 = vmatprep.subr.bf16.mxu0 %v734
        %791 = vmatpush1.bf16.msra.mxu0 %v733
        %792 = vmatprep.subr.bf16.mxu0 %v731
        %793 = vmatpush1.bf16.msra.mxu0 %v730
        %794 = vmatprep.subr.bf16.mxu0 0
        %795 = vmatpush2.bf16.msra.mxu0 0
        %796 = vmatprep.subr.bf16.mxu0 0
        %797 = vmatpush2.bf16.msra.mxu0 0
        %798 = vmatprep.subr.bf16.mxu0 0
        %799 = vmatpush2.bf16.msra.mxu0 0
        %800 = vmatprep.subr.bf16.mxu0 0
        %801 = vmatpush2.bf16.msra.mxu0 0
        %802 = vmatprep.subr.bf16.mxu0 0
        %803 = vmatpush2.bf16.msra.mxu0 0
        %804 = vmatprep.subr.bf16.mxu0 0
        %805 = vmatpush2.bf16.msra.mxu0 0
        %806 = vmatprep.subr.bf16.mxu0 0
        %807 = vmatpush2.bf16.msra.mxu0 0
        %808 = vmatprep.subr.bf16.mxu0 0
        %809 = vmatpush2.bf16.msra.mxu0 0
        %810 = vmatprep.mubr.bf16.mxu0 0
        %811 = vmatmul.mubr.bf16.gmra.mxu0 %v601
        %v812 = vpop.f32.mrf.mxu0
        %v813 = vadd.f32 %v638, %v812
        %v814 = vpop.f32.mrf.mxu0
        %v815 = vadd.f32 %v642, %v814
        %v816 = vpop.f32.mrf.mxu0
        %v817 = vpop.f32.mrf.mxu0
        %818 = vdwg.mxu0
        %819 = vmatprep.subr.bf16.mxu0 0
        %820 = vmatpush1.bf16.msra.mxu0 %v753
        %821 = vmatprep.subr.bf16.mxu0 0
        %822 = vmatpush1.bf16.msra.mxu0 %v750
        %823 = vmatprep.subr.bf16.mxu0 0
        %824 = vmatpush1.bf16.msra.mxu0 %v747
        %825 = vmatprep.subr.bf16.mxu0 0
        %826 = vmatpush1.bf16.msra.mxu0 %v744
        %827 = vmatprep.subr.bf16.mxu0 0
        %828 = vmatpush1.bf16.msra.mxu0 %v741
        %829 = vmatprep.subr.bf16.mxu0 0
        %830 = vmatpush1.bf16.msra.mxu0 %v738
        %831 = vmatprep.subr.bf16.mxu0 0
        %832 = vmatpush1.bf16.msra.mxu0 %v735
        %833 = vmatprep.subr.bf16.mxu0 0
        %834 = vmatpush1.bf16.msra.mxu0 %v732
        %835 = vmatprep.subr.bf16.mxu0 0
        %836 = vmatpush2.bf16.msra.mxu0 0
        %837 = vmatprep.subr.bf16.mxu0 0
        %838 = vmatpush2.bf16.msra.mxu0 0
        %839 = vmatprep.subr.bf16.mxu0 0
        %840 = vmatpush2.bf16.msra.mxu0 0
        %841 = vmatprep.subr.bf16.mxu0 0
        %842 = vmatpush2.bf16.msra.mxu0 0
        %843 = vmatprep.subr.bf16.mxu0 0
        %844 = vmatpush2.bf16.msra.mxu0 0
        %845 = vmatprep.subr.bf16.mxu0 0
        %846 = vmatpush2.bf16.msra.mxu0 0
        %847 = vmatprep.subr.bf16.mxu0 0
        %848 = vmatpush2.bf16.msra.mxu0 0
        %849 = vmatprep.subr.bf16.mxu0 0
        %850 = vmatpush2.bf16.msra.mxu0 0
        %851 = vmatprep.mubr.bf16.mxu0 0
        %852 = vmatmul.mubr.bf16.gmra.mxu0 %v601
        %v853 = vpop.f32.mrf.mxu0
        %v854 = vadd.f32 %v646, %v853
        %v855 = vpop.f32.mrf.mxu0
        %v856 = vpop.f32.mrf.mxu0
        %v857 = vpop.f32.mrf.mxu0
        %858 = vdwg.mxu0
        %v863 = vlaneseq
        %v864 = vshrl.u32 %v863, 7
        %v865 = vsub.s32 0, %v864
        %v866 = vrot.slane %v569, %v865
        %v867 = vlaneseq
        %v868 = vshrl.u32 %v867, 7
        %v869 = vsub.s32 0, %v868
        %v870 = vrot.slane %v570, %v869
        %v871 = vlaneseq
        %v872 = vshrl.u32 %v871, 7
        %v873 = vsub.s32 0, %v872
        %v874 = vrot.slane %v571, %v873
        %v875 = vlaneseq
        %v876 = vshrl.u32 %v875, 7
        %v877 = vsub.s32 0, %v876
        %v878 = vrot.slane %v572, %v877
        %v883 = vmul.f32 %v813, %v866
        %v884 = vmul.f32 %v813, %v870
        %v885 = vmul.f32 %v813, %v874
        %v886 = vmul.f32 %v813, %v878
        %v887 = vpack.c.bf16 %v883, %v883
        %v888 = vpack.c.bf16 %v884, %v884
        %v889 = vpack.c.bf16 %v885, %v885
        %v890 = vpack.c.bf16 %v886, %v886
        %v891 = vpack.c.bf16 %v815, %v815
        %v892 = vmul.f32 %v854, %v866
        %v893 = vmul.f32 %v854, %v870
        %v894 = vmul.f32 %v854, %v874
        %v895 = vmul.f32 %v854, %v878
        %v896 = vpack.c.bf16 %v892, %v892
        %v897 = vpack.c.bf16 %v893, %v893
        %v898 = vpack.c.bf16 %v894, %v894
        %v899 = vpack.c.bf16 %v895, %v895
        %900 = vmatprep.subr.bf16.mxu0 0
        %901 = vmatpush1.bf16.xpose.msra.mxu0 0
        %902 = vmatprep.subr.bf16.mxu0 0
        %903 = vmatpush1.bf16.xpose.msra.mxu0 0
        %904 = vmatprep.subr.bf16.mxu0 0
        %905 = vmatpush1.bf16.xpose.msra.mxu0 0
        %906 = vmatprep.subr.bf16.mxu0 0
        %907 = vmatpush1.bf16.xpose.msra.mxu0 0
        %908 = vmatprep.subr.bf16.mxu0 0
        %909 = vmatpush1.bf16.xpose.msra.mxu0 0
        %910 = vmatprep.subr.bf16.mxu0 0
        %911 = vmatpush1.bf16.xpose.msra.mxu0 0
        %912 = vmatprep.subr.bf16.mxu0 0
        %913 = vmatpush1.bf16.xpose.msra.mxu0 0
        %914 = vmatprep.subr.bf16.mxu0 0
        %915 = vmatpush1.bf16.xpose.msra.mxu0 %v891
        %916 = vmatprep.subr.bf16.mxu0 0
        %917 = vmatpush2.bf16.xpose.msra.mxu0 0
        %918 = vmatprep.subr.bf16.mxu0 0
        %919 = vmatpush2.bf16.xpose.msra.mxu0 0
        %920 = vmatprep.subr.bf16.mxu0 0
        %921 = vmatpush2.bf16.xpose.msra.mxu0 0
        %922 = vmatprep.subr.bf16.mxu0 0
        %923 = vmatpush2.bf16.xpose.msra.mxu0 0
        %924 = vmatprep.subr.bf16.mxu0 0
        %925 = vmatpush2.bf16.xpose.msra.mxu0 0
        %926 = vmatprep.subr.bf16.mxu0 0
        %927 = vmatpush2.bf16.xpose.msra.mxu0 0
        %928 = vmatprep.subr.bf16.mxu0 0
        %929 = vmatpush2.bf16.xpose.msra.mxu0 0
        %930 = vmatprep.subr.bf16.mxu0 0
        %931 = vmatpush2.bf16.xpose.msra.mxu0 0
        %932 = vmatprep.mubr.bf16.mxu0 0
        %933 = vmatmul.mubr.bf16.gmra.mxu0 %v887
        %v934 = vpop.f32.mrf.mxu0
        %v935 = vadd.f32 0.0, %v934
        %v936 = vpop.f32.mrf.mxu0
        %v937 = vpop.f32.mrf.mxu0
        %v938 = vpop.f32.mrf.mxu0
        %939 = vdwg.mxu0
        %940 = vmatprep.subr.bf16.mxu0 0
        %941 = vmatpush1.bf16.xpose.msra.mxu0 0
        %942 = vmatprep.subr.bf16.mxu0 0
        %943 = vmatpush1.bf16.xpose.msra.mxu0 0
        %944 = vmatprep.subr.bf16.mxu0 0
        %945 = vmatpush1.bf16.xpose.msra.mxu0 0
        %946 = vmatprep.subr.bf16.mxu0 0
        %947 = vmatpush1.bf16.xpose.msra.mxu0 0
        %948 = vmatprep.subr.bf16.mxu0 0
        %949 = vmatpush1.bf16.xpose.msra.mxu0 0
        %950 = vmatprep.subr.bf16.mxu0 0
        %951 = vmatpush1.bf16.xpose.msra.mxu0 0
        %952 = vmatprep.subr.bf16.mxu0 0
        %953 = vmatpush1.bf16.xpose.msra.mxu0 0
        %954 = vmatprep.subr.bf16.mxu0 0
        %955 = vmatpush1.bf16.xpose.msra.mxu0 %v891
        %956 = vmatprep.subr.bf16.mxu0 0
        %957 = vmatpush2.bf16.xpose.msra.mxu0 0
        %958 = vmatprep.subr.bf16.mxu0 0
        %959 = vmatpush2.bf16.xpose.msra.mxu0 0
        %960 = vmatprep.subr.bf16.mxu0 0
        %961 = vmatpush2.bf16.xpose.msra.mxu0 0
        %962 = vmatprep.subr.bf16.mxu0 0
        %963 = vmatpush2.bf16.xpose.msra.mxu0 0
        %964 = vmatprep.subr.bf16.mxu0 0
        %965 = vmatpush2.bf16.xpose.msra.mxu0 0
        %966 = vmatprep.subr.bf16.mxu0 0
        %967 = vmatpush2.bf16.xpose.msra.mxu0 0
        %968 = vmatprep.subr.bf16.mxu0 0
        %969 = vmatpush2.bf16.xpose.msra.mxu0 0
        %970 = vmatprep.subr.bf16.mxu0 0
        %971 = vmatpush2.bf16.xpose.msra.mxu0 0
        %972 = vmatprep.mubr.bf16.mxu0 0
        %973 = vmatmul.mubr.bf16.gmra.mxu0 %v888
        %v974 = vpop.f32.mrf.mxu0
        %v975 = vadd.f32 0.0, %v974
        %v976 = vpop.f32.mrf.mxu0
        %v977 = vpop.f32.mrf.mxu0
        %v978 = vpop.f32.mrf.mxu0
        %979 = vdwg.mxu0
        %980 = vmatprep.subr.bf16.mxu0 0
        %981 = vmatpush1.bf16.xpose.msra.mxu0 0
        %982 = vmatprep.subr.bf16.mxu0 0
        %983 = vmatpush1.bf16.xpose.msra.mxu0 0
        %984 = vmatprep.subr.bf16.mxu0 0
        %985 = vmatpush1.bf16.xpose.msra.mxu0 0
        %986 = vmatprep.subr.bf16.mxu0 0
        %987 = vmatpush1.bf16.xpose.msra.mxu0 0
        %988 = vmatprep.subr.bf16.mxu0 0
        %989 = vmatpush1.bf16.xpose.msra.mxu0 0
        %990 = vmatprep.subr.bf16.mxu0 0
        %991 = vmatpush1.bf16.xpose.msra.mxu0 0
        %992 = vmatprep.subr.bf16.mxu0 0
        %993 = vmatpush1.bf16.xpose.msra.mxu0 0
        %994 = vmatprep.subr.bf16.mxu0 0
        %995 = vmatpush1.bf16.xpose.msra.mxu0 %v891
        %996 = vmatprep.subr.bf16.mxu0 0
        %997 = vmatpush2.bf16.xpose.msra.mxu0 0
        %998 = vmatprep.subr.bf16.mxu0 0
        %999 = vmatpush2.bf16.xpose.msra.mxu0 0
        %1000 = vmatprep.subr.bf16.mxu0 0
        %1001 = vmatpush2.bf16.xpose.msra.mxu0 0
        %1002 = vmatprep.subr.bf16.mxu0 0
        %1003 = vmatpush2.bf16.xpose.msra.mxu0 0
        %1004 = vmatprep.subr.bf16.mxu0 0
        %1005 = vmatpush2.bf16.xpose.msra.mxu0 0
        %1006 = vmatprep.subr.bf16.mxu0 0
        %1007 = vmatpush2.bf16.xpose.msra.mxu0 0
        %1008 = vmatprep.subr.bf16.mxu0 0
        %1009 = vmatpush2.bf16.xpose.msra.mxu0 0
        %1010 = vmatprep.subr.bf16.mxu0 0
        %1011 = vmatpush2.bf16.xpose.msra.mxu0 0
        %1012 = vmatprep.mubr.bf16.mxu0 0
        %1013 = vmatmul.mubr.bf16.gmra.mxu0 %v889
        %v1014 = vpop.f32.mrf.mxu0
        %v1015 = vadd.f32 0.0, %v1014
        %v1016 = vpop.f32.mrf.mxu0
        %v1017 = vpop.f32.mrf.mxu0
        %v1018 = vpop.f32.mrf.mxu0
        %1019 = vdwg.mxu0
        %1020 = vmatprep.subr.bf16.mxu0 0
        %1021 = vmatpush1.bf16.xpose.msra.mxu0 0
        %1022 = vmatprep.subr.bf16.mxu0 0
        %1023 = vmatpush1.bf16.xpose.msra.mxu0 0
        %1024 = vmatprep.subr.bf16.mxu0 0
        %1025 = vmatpush1.bf16.xpose.msra.mxu0 0
        %1026 = vmatprep.subr.bf16.mxu0 0
        %1027 = vmatpush1.bf16.xpose.msra.mxu0 0
        %1028 = vmatprep.subr.bf16.mxu0 0
        %1029 = vmatpush1.bf16.xpose.msra.mxu0 0
        %1030 = vmatprep.subr.bf16.mxu0 0
        %1031 = vmatpush1.bf16.xpose.msra.mxu0 0
        %1032 = vmatprep.subr.bf16.mxu0 0
        %1033 = vmatpush1.bf16.xpose.msra.mxu0 0
        %1034 = vmatprep.subr.bf16.mxu0 0
        %1035 = vmatpush1.bf16.xpose.msra.mxu0 %v891
        %1036 = vmatprep.subr.bf16.mxu0 0
        %1037 = vmatpush2.bf16.xpose.msra.mxu0 0
        %1038 = vmatprep.subr.bf16.mxu0 0
        %1039 = vmatpush2.bf16.xpose.msra.mxu0 0
        %1040 = vmatprep.subr.bf16.mxu0 0
        %1041 = vmatpush2.bf16.xpose.msra.mxu0 0
        %1042 = vmatprep.subr.bf16.mxu0 0
        %1043 = vmatpush2.bf16.xpose.msra.mxu0 0
        %1044 = vmatprep.subr.bf16.mxu0 0
        %1045 = vmatpush2.bf16.xpose.msra.mxu0 0
        %1046 = vmatprep.subr.bf16.mxu0 0
        %1047 = vmatpush2.bf16.xpose.msra.mxu0 0
        %1048 = vmatprep.subr.bf16.mxu0 0
        %1049 = vmatpush2.bf16.xpose.msra.mxu0 0
        %1050 = vmatprep.subr.bf16.mxu0 0
        %1051 = vmatpush2.bf16.xpose.msra.mxu0 0
        %1052 = vmatprep.mubr.bf16.mxu0 0
        %1053 = vmatmul.mubr.bf16.gmra.mxu0 %v890
        %v1054 = vpop.f32.mrf.mxu0
        %v1055 = vadd.f32 0.0, %v1054
        %v1056 = vpop.f32.mrf.mxu0
        %v1057 = vpop.f32.mrf.mxu0
        %v1058 = vpop.f32.mrf.mxu0
        %1059 = vdwg.mxu0
        %vm1060 = vcmask 64512
        %v1061 = vsel %vm1060, %v935, -inf
        %1062 = vmax.xlane.f32.xlu0 %v1061
        %v1063 = vpop.xlane.xlu0 %1062
        %v1064 = vsel %vm1060, %v975, -inf
        %1065 = vmax.xlane.f32.xlu0 %v1064
        %v1066 = vpop.xlane.xlu0 %1065
        %v1067 = vsel %vm1060, %v1015, -inf
        %1068 = vmax.xlane.f32.xlu0 %v1067
        %v1069 = vpop.xlane.xlu0 %1068
        %v1070 = vsel %vm1060, %v1055, -inf
        %1071 = vmax.xlane.f32.xlu0 %v1070
        %v1072 = vpop.xlane.xlu0 %1071
        %v1073 = vsub.f32 %v935, %v1063
        %v1074 = vsub.f32 %v975, %v1066
        %v1075 = vsub.f32 %v1015, %v1069
        %v1076 = vsub.f32 %v1055, %v1072
        %v1077 = vmul.f32 %v1073, 1.442695
        %v1078 = vpow.pop %v1077
        %v1079 = vmul.f32 %v1074, 1.442695
        %v1080 = vpow.pop %v1079
        %v1081 = vmul.f32 %v1075, 1.442695
        %v1082 = vpow.pop %v1081
        %v1083 = vmul.f32 %v1076, 1.442695
        %v1084 = vpow.pop %v1083
        %v1085 = vsel %vm1060, %v1078, 0.0
        %1086 = vadd.xlane.f32.xlu0 %v1085
        %v1087 = vpop.xlane.xlu0 %1086
        %v1088 = vsel %vm1060, %v1080, 0.0
        %1089 = vadd.xlane.f32.xlu0 %v1088
        %v1090 = vpop.xlane.xlu0 %1089
        %v1091 = vsel %vm1060, %v1082, 0.0
        %1092 = vadd.xlane.f32.xlu0 %v1091
        %v1093 = vpop.xlane.xlu0 %1092
        %v1094 = vsel %vm1060, %v1084, 0.0
        %1095 = vadd.xlane.f32.xlu0 %v1094
        %v1096 = vpop.xlane.xlu0 %1095
        %v1097 = vrcp.pop %v1087
        %v1098 = vrcp.pop %v1090
        %v1099 = vrcp.pop %v1093
        %v1100 = vrcp.pop %v1096
        %v1101 = vmul.f32 %v1078, %v1097
        %v1102 = vmul.f32 %v1080, %v1098
        %v1103 = vmul.f32 %v1082, %v1099
        %v1104 = vmul.f32 %v1084, %v1100
        %v1105 = vpack.c.bf16 %v1101, %v1101
        %v1106 = vpack.c.bf16 %v1102, %v1102
        %v1107 = vpack.c.bf16 %v1103, %v1103
        %v1108 = vpack.c.bf16 %v1104, %v1104
        %v1110 = vsel %vm1060, %v1105, 0
        %vm1112 = vcmask 1043456
        %v1114 = vsel %vm1112, %v896, 0
        %1116 = vmatprep.subr.bf16.mxu0 0
        %1117 = vmatpush1.bf16.msra.mxu0 0
        %1118 = vmatprep.subr.bf16.mxu0 0
        %1119 = vmatpush1.bf16.msra.mxu0 0
        %1120 = vmatprep.subr.bf16.mxu0 0
        %1121 = vmatpush1.bf16.msra.mxu0 0
        %1122 = vmatprep.subr.bf16.mxu0 0
        %1123 = vmatpush1.bf16.msra.mxu0 0
        %1124 = vmatprep.subr.bf16.mxu0 0
        %1125 = vmatpush1.bf16.msra.mxu0 0
        %1126 = vmatprep.subr.bf16.mxu0 0
        %1127 = vmatpush1.bf16.msra.mxu0 0
        %1128 = vmatprep.subr.bf16.mxu0 0
        %1129 = vmatpush1.bf16.msra.mxu0 0
        %1130 = vmatprep.subr.bf16.mxu0 0
        %1131 = vmatpush1.bf16.msra.mxu0 %v1114
        %1132 = vmatprep.subr.bf16.mxu0 0
        %1133 = vmatpush2.bf16.msra.mxu0 0
        %1134 = vmatprep.subr.bf16.mxu0 0
        %1135 = vmatpush2.bf16.msra.mxu0 0
        %1136 = vmatprep.subr.bf16.mxu0 0
        %1137 = vmatpush2.bf16.msra.mxu0 0
        %1138 = vmatprep.subr.bf16.mxu0 0
        %1139 = vmatpush2.bf16.msra.mxu0 0
        %1140 = vmatprep.subr.bf16.mxu0 0
        %1141 = vmatpush2.bf16.msra.mxu0 0
        %1142 = vmatprep.subr.bf16.mxu0 0
        %1143 = vmatpush2.bf16.msra.mxu0 0
        %1144 = vmatprep.subr.bf16.mxu0 0
        %1145 = vmatpush2.bf16.msra.mxu0 0
        %1146 = vmatprep.subr.bf16.mxu0 0
        %1147 = vmatpush2.bf16.msra.mxu0 0
        %1148 = vmatprep.mubr.bf16.mxu0 0
        %1149 = vmatmul.mubr.bf16.gmra.mxu0 %v1110
        %v1150 = vpop.f32.mrf.mxu0
        %v1151 = vadd.f32 0.0, %v1150
        %v1152 = vpop.f32.mrf.mxu0
        %v1153 = vpop.f32.mrf.mxu0
        %v1154 = vpop.f32.mrf.mxu0
        %1155 = vdwg.mxu0
        %v1157 = vsel %vm1060, %v1106, 0
        %v1160 = vsel %vm1112, %v897, 0
        %1162 = vmatprep.subr.bf16.mxu0 0
        %1163 = vmatpush1.bf16.msra.mxu0 0
        %1164 = vmatprep.subr.bf16.mxu0 0
        %1165 = vmatpush1.bf16.msra.mxu0 0
        %1166 = vmatprep.subr.bf16.mxu0 0
        %1167 = vmatpush1.bf16.msra.mxu0 0
        %1168 = vmatprep.subr.bf16.mxu0 0
        %1169 = vmatpush1.bf16.msra.mxu0 0
        %1170 = vmatprep.subr.bf16.mxu0 0
        %1171 = vmatpush1.bf16.msra.mxu0 0
        %1172 = vmatprep.subr.bf16.mxu0 0
        %1173 = vmatpush1.bf16.msra.mxu0 0
        %1174 = vmatprep.subr.bf16.mxu0 0
        %1175 = vmatpush1.bf16.msra.mxu0 0
        %1176 = vmatprep.subr.bf16.mxu0 0
        %1177 = vmatpush1.bf16.msra.mxu0 %v1160
        %1178 = vmatprep.subr.bf16.mxu0 0
        %1179 = vmatpush2.bf16.msra.mxu0 0
        %1180 = vmatprep.subr.bf16.mxu0 0
        %1181 = vmatpush2.bf16.msra.mxu0 0
        %1182 = vmatprep.subr.bf16.mxu0 0
        %1183 = vmatpush2.bf16.msra.mxu0 0
        %1184 = vmatprep.subr.bf16.mxu0 0
        %1185 = vmatpush2.bf16.msra.mxu0 0
        %1186 = vmatprep.subr.bf16.mxu0 0
        %1187 = vmatpush2.bf16.msra.mxu0 0
        %1188 = vmatprep.subr.bf16.mxu0 0
        %1189 = vmatpush2.bf16.msra.mxu0 0
        %1190 = vmatprep.subr.bf16.mxu0 0
        %1191 = vmatpush2.bf16.msra.mxu0 0
        %1192 = vmatprep.subr.bf16.mxu0 0
        %1193 = vmatpush2.bf16.msra.mxu0 0
        %1194 = vmatprep.mubr.bf16.mxu0 0
        %1195 = vmatmul.mubr.bf16.gmra.mxu0 %v1157
        %v1196 = vpop.f32.mrf.mxu0
        %v1197 = vadd.f32 0.0, %v1196
        %v1198 = vpop.f32.mrf.mxu0
        %v1199 = vpop.f32.mrf.mxu0
        %v1200 = vpop.f32.mrf.mxu0
        %1201 = vdwg.mxu0
        %v1203 = vsel %vm1060, %v1107, 0
        %v1206 = vsel %vm1112, %v898, 0
        %1208 = vmatprep.subr.bf16.mxu0 0
        %1209 = vmatpush1.bf16.msra.mxu0 0
        %1210 = vmatprep.subr.bf16.mxu0 0
        %1211 = vmatpush1.bf16.msra.mxu0 0
        %1212 = vmatprep.subr.bf16.mxu0 0
        %1213 = vmatpush1.bf16.msra.mxu0 0
        %1214 = vmatprep.subr.bf16.mxu0 0
        %1215 = vmatpush1.bf16.msra.mxu0 0
        %1216 = vmatprep.subr.bf16.mxu0 0
        %1217 = vmatpush1.bf16.msra.mxu0 0
        %1218 = vmatprep.subr.bf16.mxu0 0
        %1219 = vmatpush1.bf16.msra.mxu0 0
        %1220 = vmatprep.subr.bf16.mxu0 0
        %1221 = vmatpush1.bf16.msra.mxu0 0
        %1222 = vmatprep.subr.bf16.mxu0 0
        %1223 = vmatpush1.bf16.msra.mxu0 %v1206
        %1224 = vmatprep.subr.bf16.mxu0 0
        %1225 = vmatpush2.bf16.msra.mxu0 0
        %1226 = vmatprep.subr.bf16.mxu0 0
        %1227 = vmatpush2.bf16.msra.mxu0 0
        %1228 = vmatprep.subr.bf16.mxu0 0
        %1229 = vmatpush2.bf16.msra.mxu0 0
        %1230 = vmatprep.subr.bf16.mxu0 0
        %1231 = vmatpush2.bf16.msra.mxu0 0
        %1232 = vmatprep.subr.bf16.mxu0 0
        %1233 = vmatpush2.bf16.msra.mxu0 0
        %1234 = vmatprep.subr.bf16.mxu0 0
        %1235 = vmatpush2.bf16.msra.mxu0 0
        %1236 = vmatprep.subr.bf16.mxu0 0
        %1237 = vmatpush2.bf16.msra.mxu0 0
        %1238 = vmatprep.subr.bf16.mxu0 0
        %1239 = vmatpush2.bf16.msra.mxu0 0
        %1240 = vmatprep.mubr.bf16.mxu0 0
        %1241 = vmatmul.mubr.bf16.gmra.mxu0 %v1203
        %v1242 = vpop.f32.mrf.mxu0
        %v1243 = vadd.f32 0.0, %v1242
        %v1244 = vpop.f32.mrf.mxu0
        %v1245 = vpop.f32.mrf.mxu0
        %v1246 = vpop.f32.mrf.mxu0
        %1247 = vdwg.mxu0
        %v1249 = vsel %vm1060, %v1108, 0
        %v1252 = vsel %vm1112, %v899, 0
        %1254 = vmatprep.subr.bf16.mxu0 0
        %1255 = vmatpush1.bf16.msra.mxu0 0
        %1256 = vmatprep.subr.bf16.mxu0 0
        %1257 = vmatpush1.bf16.msra.mxu0 0
        %1258 = vmatprep.subr.bf16.mxu0 0
        %1259 = vmatpush1.bf16.msra.mxu0 0
        %1260 = vmatprep.subr.bf16.mxu0 0
        %1261 = vmatpush1.bf16.msra.mxu0 0
        %1262 = vmatprep.subr.bf16.mxu0 0
        %1263 = vmatpush1.bf16.msra.mxu0 0
        %1264 = vmatprep.subr.bf16.mxu0 0
        %1265 = vmatpush1.bf16.msra.mxu0 0
        %1266 = vmatprep.subr.bf16.mxu0 0
        %1267 = vmatpush1.bf16.msra.mxu0 0
        %1268 = vmatprep.subr.bf16.mxu0 0
        %1269 = vmatpush1.bf16.msra.mxu0 %v1252
        %1270 = vmatprep.subr.bf16.mxu0 0
        %1271 = vmatpush2.bf16.msra.mxu0 0
        %1272 = vmatprep.subr.bf16.mxu0 0
        %1273 = vmatpush2.bf16.msra.mxu0 0
        %1274 = vmatprep.subr.bf16.mxu0 0
        %1275 = vmatpush2.bf16.msra.mxu0 0
        %1276 = vmatprep.subr.bf16.mxu0 0
        %1277 = vmatpush2.bf16.msra.mxu0 0
        %1278 = vmatprep.subr.bf16.mxu0 0
        %1279 = vmatpush2.bf16.msra.mxu0 0
        %1280 = vmatprep.subr.bf16.mxu0 0
        %1281 = vmatpush2.bf16.msra.mxu0 0
        %1282 = vmatprep.subr.bf16.mxu0 0
        %1283 = vmatpush2.bf16.msra.mxu0 0
        %1284 = vmatprep.subr.bf16.mxu0 0
        %1285 = vmatpush2.bf16.msra.mxu0 0
        %1286 = vmatprep.mubr.bf16.mxu0 0
        %1287 = vmatmul.mubr.bf16.gmra.mxu0 %v1249
        %v1288 = vpop.f32.mrf.mxu0
        %v1289 = vadd.f32 0.0, %v1288
        %v1290 = vpop.f32.mrf.mxu0
        %v1291 = vpop.f32.mrf.mxu0
        %v1292 = vpop.f32.mrf.mxu0
        %1293 = vdwg.mxu0
        %v1294 = vadd.f32 %v1151, %v1197
        %v1295 = vadd.f32 %v1294, %v1243
        %v1296 = vadd.f32 %v1295, %v1289
        %v1297 = vpack.c.bf16 %v1296, %v1296
        %v1298 = vld [vmem:[#allocation8] sm:$0xf]
        %v1299 = vld [vmem:[#allocation8 + $0x4] sm:$0xf]
        %v1300 = vld [vmem:[#allocation8 + $0x8] sm:$0xf]
        %v1301 = vld [vmem:[#allocation8 + $0xc] sm:$0xf]
        %v1302 = vld [vmem:[#allocation8 + $0x10] sm:$0xf]
        %v1303 = vld [vmem:[#allocation8 + $0x14] sm:$0xf]
        %v1304 = vld [vmem:[#allocation8 + $0x18] sm:$0xf]
        %v1305 = vld [vmem:[#allocation8 + $0x1c] sm:$0xf]
        %v1306 = vld [vmem:[#allocation8 + $0x20] sm:$0xf]
        %v1307 = vld [vmem:[#allocation8 + $0x24] sm:$0xf]
        %v1308 = vld [vmem:[#allocation8 + $0x28] sm:$0xf]
        %v1309 = vld [vmem:[#allocation8 + $0x2c] sm:$0xf]
        %v1310 = vld [vmem:[#allocation8 + $0x30] sm:$0xf]
        %v1311 = vld [vmem:[#allocation8 + $0x34] sm:$0xf]
        %v1312 = vld [vmem:[#allocation8 + $0x38] sm:$0xf]
        %v1313 = vld [vmem:[#allocation8 + $0x3c] sm:$0xf]
        %v1315 = vlaneseq
        %v1316 = vshrl.u32 %v1315, 7
        %v1317 = vsub.s32 0, %v1316
        %v1318 = vrot.slane %v566, %v1317
        %v1336 = vunpack.c.l.b16 %v1298
        %v1337 = vunpack.c.l.b16 %v1299
        %v1338 = vunpack.c.l.b16 %v1300
        %v1339 = vunpack.c.l.b16 %v1301
        %v1340 = vunpack.c.l.b16 %v1302
        %v1341 = vunpack.c.l.b16 %v1303
        %v1342 = vunpack.c.l.b16 %v1304
        %v1343 = vunpack.c.l.b16 %v1305
        %v1344 = vunpack.c.l.b16 %v1306
        %v1345 = vunpack.c.l.b16 %v1307
        %v1346 = vunpack.c.l.b16 %v1308
        %v1347 = vunpack.c.l.b16 %v1309
        %v1348 = vunpack.c.l.b16 %v1310
        %v1349 = vunpack.c.l.b16 %v1311
        %v1350 = vunpack.c.l.b16 %v1312
        %v1351 = vunpack.c.l.b16 %v1313
        %v1352 = vpack.c.b16 %v1337, %v1336
        %v1353 = vpack.c.b16 %v1339, %v1338
        %v1354 = vpack.c.b16 %v1341, %v1340
        %v1355 = vpack.c.b16 %v1343, %v1342
        %v1356 = vpack.c.b16 %v1345, %v1344
        %v1357 = vpack.c.b16 %v1347, %v1346
        %v1358 = vpack.c.b16 %v1349, %v1348
        %v1359 = vpack.c.b16 %v1351, %v1350
        %1368 = vmatprep.subr.bf16.mxu0 0
        %1369 = vmatpush1.bf16.msra.mxu0 %v1359
        %1370 = vmatprep.subr.bf16.mxu0 0
        %1371 = vmatpush1.bf16.msra.mxu0 %v1358
        %1372 = vmatprep.subr.bf16.mxu0 0
        %1373 = vmatpush1.bf16.msra.mxu0 %v1357
        %1374 = vmatprep.subr.bf16.mxu0 0
        %1375 = vmatpush1.bf16.msra.mxu0 %v1356
        %1376 = vmatprep.subr.bf16.mxu0 0
        %1377 = vmatpush1.bf16.msra.mxu0 %v1355
        %1378 = vmatprep.subr.bf16.mxu0 0
        %1379 = vmatpush1.bf16.msra.mxu0 %v1354
        %1380 = vmatprep.subr.bf16.mxu0 0
        %1381 = vmatpush1.bf16.msra.mxu0 %v1353
        %1382 = vmatprep.subr.bf16.mxu0 0
        %1383 = vmatpush1.bf16.msra.mxu0 %v1352
        %1384 = vmatprep.subr.bf16.mxu0 0
        %1385 = vmatpush2.bf16.msra.mxu0 0
        %1386 = vmatprep.subr.bf16.mxu0 0
        %1387 = vmatpush2.bf16.msra.mxu0 0
        %1388 = vmatprep.subr.bf16.mxu0 0
        %1389 = vmatpush2.bf16.msra.mxu0 0
        %1390 = vmatprep.subr.bf16.mxu0 0
        %1391 = vmatpush2.bf16.msra.mxu0 0
        %1392 = vmatprep.subr.bf16.mxu0 0
        %1393 = vmatpush2.bf16.msra.mxu0 0
        %1394 = vmatprep.subr.bf16.mxu0 0
        %1395 = vmatpush2.bf16.msra.mxu0 0
        %1396 = vmatprep.subr.bf16.mxu0 0
        %1397 = vmatpush2.bf16.msra.mxu0 0
        %1398 = vmatprep.subr.bf16.mxu0 0
        %1399 = vmatpush2.bf16.msra.mxu0 0
        %1400 = vmatprep.mubr.bf16.mxu0 0
        %1401 = vmatmul.mubr.bf16.gmra.mxu0 %v1297
        %v1402 = vpop.f32.mrf.mxu0
        %v1403 = vadd.f32 %v1318, %v1402
        %v1404 = vpop.f32.mrf.mxu0
        %v1405 = vpop.f32.mrf.mxu0
        %v1406 = vpop.f32.mrf.mxu0
        %1407 = vdwg.mxu0
        %v1408 = vadd.f32 %v557, %v1403
        %1409 = vadd.xlane.f32.xlu0 %v1408
        %v1410 = vpop.xlane.xlu0 %1409
        %v1411 = vmul.f32 %v1410, 0.03125
        %v1412 = vsub.f32 %v1408, %v1411
        %v1413 = vsel %vm578, %v1412, 0.0
        %v1414 = vmul.f32 %v1413, %v1413
        %1415 = vadd.xlane.f32.xlu0 %v1414
        %v1416 = vpop.xlane.xlu0 %1415
        %v1417 = vmul.f32 %v1416, 0.03125
        %v1418 = vadd.f32 %v1417, 1e-05
        %v1419 = vrsqrt.pop %v1418
        %v1420 = vmul.f32 %v1413, %v1419
        %v1422 = vlaneseq
        %v1423 = vshrl.u32 %v1422, 7
        %v1424 = vsub.s32 0, %v1423
        %v1425 = vrot.slane %v563, %v1424
        %v1427 = vmul.f32 %v1420, %v1425
        %v1429 = vlaneseq
        %v1430 = vshrl.u32 %v1429, 7
        %v1431 = vsub.s32 0, %v1430
        %v1432 = vrot.slane %v564, %v1431
        %v1434 = vadd.f32 %v1427, %v1432
        %v1435 = vpack.c.bf16 %v1434, %v1434
        %v1436 = vld [vmem:[#allocation10] sm:$0xf]
        %v1437 = vld [vmem:[#allocation10 + $0x4] sm:$0xf]
        %v1438 = vld [vmem:[#allocation10 + $0x8] sm:$0xf]
        %v1439 = vld [vmem:[#allocation10 + $0xc] sm:$0xf]
        %v1440 = vld [vmem:[#allocation10 + $0x10] sm:$0xf]
        %v1441 = vld [vmem:[#allocation10 + $0x14] sm:$0xf]
        %v1442 = vld [vmem:[#allocation10 + $0x18] sm:$0xf]
        %v1443 = vld [vmem:[#allocation10 + $0x1c] sm:$0xf]
        %v1444 = vld [vmem:[#allocation10 + $0x20] sm:$0xf]
        %v1445 = vld [vmem:[#allocation10 + $0x24] sm:$0xf]
        %v1446 = vld [vmem:[#allocation10 + $0x28] sm:$0xf]
        %v1447 = vld [vmem:[#allocation10 + $0x2c] sm:$0xf]
        %v1448 = vld [vmem:[#allocation10 + $0x30] sm:$0xf]
        %v1449 = vld [vmem:[#allocation10 + $0x34] sm:$0xf]
        %v1450 = vld [vmem:[#allocation10 + $0x38] sm:$0xf]
        %v1451 = vld [vmem:[#allocation10 + $0x3c] sm:$0xf]
        %v1453 = vlaneseq
        %v1454 = vshrl.u32 %v1453, 7
        %v1455 = vsub.s32 0, %v1454
        %v1456 = vrot.slane %v567, %v1455
        %v1474 = vunpack.c.l.b16 %v1436
        %v1475 = vunpack.c.l.b16 %v1437
        %v1476 = vunpack.c.l.b16 %v1438
        %v1477 = vunpack.c.l.b16 %v1439
        %v1478 = vunpack.c.l.b16 %v1440
        %v1479 = vunpack.c.l.b16 %v1441
        %v1480 = vunpack.c.l.b16 %v1442
        %v1481 = vunpack.c.l.b16 %v1443
        %v1482 = vunpack.c.l.b16 %v1444
        %v1483 = vunpack.c.l.b16 %v1445
        %v1484 = vunpack.c.l.b16 %v1446
        %v1485 = vunpack.c.l.b16 %v1447
        %v1486 = vunpack.c.l.b16 %v1448
        %v1487 = vunpack.c.l.b16 %v1449
        %v1488 = vunpack.c.l.b16 %v1450
        %v1489 = vunpack.c.l.b16 %v1451
        %v1490 = vpack.c.b16 %v1475, %v1474
        %v1491 = vpack.c.b16 %v1477, %v1476
        %v1492 = vpack.c.b16 %v1479, %v1478
        %v1493 = vpack.c.b16 %v1481, %v1480
        %v1494 = vpack.c.b16 %v1483, %v1482
        %v1495 = vpack.c.b16 %v1485, %v1484
        %v1496 = vpack.c.b16 %v1487, %v1486
        %v1497 = vpack.c.b16 %v1489, %v1488
        %1506 = vmatprep.subr.bf16.mxu0 0
        %1507 = vmatpush1.bf16.msra.mxu0 %v1497
        %1508 = vmatprep.subr.bf16.mxu0 0
        %1509 = vmatpush1.bf16.msra.mxu0 %v1496
        %1510 = vmatprep.subr.bf16.mxu0 0
        %1511 = vmatpush1.bf16.msra.mxu0 %v1495
        %1512 = vmatprep.subr.bf16.mxu0 0
        %1513 = vmatpush1.bf16.msra.mxu0 %v1494
        %1514 = vmatprep.subr.bf16.mxu0 0
        %1515 = vmatpush1.bf16.msra.mxu0 %v1493
        %1516 = vmatprep.subr.bf16.mxu0 0
        %1517 = vmatpush1.bf16.msra.mxu0 %v1492
        %1518 = vmatprep.subr.bf16.mxu0 0
        %1519 = vmatpush1.bf16.msra.mxu0 %v1491
        %1520 = vmatprep.subr.bf16.mxu0 0
        %1521 = vmatpush1.bf16.msra.mxu0 %v1490
        %1522 = vmatprep.subr.bf16.mxu0 0
        %1523 = vmatpush2.bf16.msra.mxu0 0
        %1524 = vmatprep.subr.bf16.mxu0 0
        %1525 = vmatpush2.bf16.msra.mxu0 0
        %1526 = vmatprep.subr.bf16.mxu0 0
        %1527 = vmatpush2.bf16.msra.mxu0 0
        %1528 = vmatprep.subr.bf16.mxu0 0
        %1529 = vmatpush2.bf16.msra.mxu0 0
        %1530 = vmatprep.subr.bf16.mxu0 0
        %1531 = vmatpush2.bf16.msra.mxu0 0
        %1532 = vmatprep.subr.bf16.mxu0 0
        %1533 = vmatpush2.bf16.msra.mxu0 0
        %1534 = vmatprep.subr.bf16.mxu0 0
        %1535 = vmatpush2.bf16.msra.mxu0 0
        %1536 = vmatprep.subr.bf16.mxu0 0
        %1537 = vmatpush2.bf16.msra.mxu0 0
        %1538 = vmatprep.mubr.bf16.mxu0 0
        %1539 = vmatmul.mubr.bf16.gmra.mxu0 %v1435
        %v1540 = vpop.f32.mrf.mxu0
        %v1541 = vadd.f32 %v1456, %v1540
        %v1542 = vpop.f32.mrf.mxu0
        %v1543 = vpop.f32.mrf.mxu0
        %v1544 = vpop.f32.mrf.mxu0
        %1545 = vdwg.mxu0
        %v1546 = vmul.f32 %v1541, 0.5
        %v1547 = vmul.f32 %v1541, 0.70710677
        %v1548 = verf.f32.pop %v1547
        %v1549 = vadd.f32 %v1548, 1.0
        %v1550 = vmul.f32 %v1546, %v1549
        %v1551 = vpack.c.bf16 %v1550, %v1550
        %v1552 = vld [vmem:[#allocation11] sm:$0xf]
        %v1553 = vld [vmem:[#allocation11 + $0x4] sm:$0xf]
        %v1554 = vld [vmem:[#allocation11 + $0x8] sm:$0xf]
        %v1555 = vld [vmem:[#allocation11 + $0xc] sm:$0xf]
        %v1556 = vld [vmem:[#allocation11 + $0x10] sm:$0xf]
        %v1557 = vld [vmem:[#allocation11 + $0x14] sm:$0xf]
        %v1558 = vld [vmem:[#allocation11 + $0x18] sm:$0xf]
        %v1559 = vld [vmem:[#allocation11 + $0x1c] sm:$0xf]
        %v1560 = vld [vmem:[#allocation11 + $0x20] sm:$0xf]
        %v1561 = vld [vmem:[#allocation11 + $0x24] sm:$0xf]
        %v1562 = vld [vmem:[#allocation11 + $0x28] sm:$0xf]
        %v1563 = vld [vmem:[#allocation11 + $0x2c] sm:$0xf]
        %v1564 = vld [vmem:[#allocation11 + $0x30] sm:$0xf]
        %v1565 = vld [vmem:[#allocation11 + $0x34] sm:$0xf]
        %v1566 = vld [vmem:[#allocation11 + $0x38] sm:$0xf]
        %v1567 = vld [vmem:[#allocation11 + $0x3c] sm:$0xf]
        %v1569 = vlaneseq
        %v1570 = vshrl.u32 %v1569, 7
        %v1571 = vsub.s32 0, %v1570
        %v1572 = vrot.slane %v568, %v1571
        %v1590 = vunpack.c.l.b16 %v1552
        %v1591 = vunpack.c.l.b16 %v1553
        %v1592 = vunpack.c.l.b16 %v1554
        %v1593 = vunpack.c.l.b16 %v1555
        %v1594 = vunpack.c.l.b16 %v1556
        %v1595 = vunpack.c.l.b16 %v1557
        %v1596 = vunpack.c.l.b16 %v1558
        %v1597 = vunpack.c.l.b16 %v1559
        %v1598 = vunpack.c.l.b16 %v1560
        %v1599 = vunpack.c.l.b16 %v1561
        %v1600 = vunpack.c.l.b16 %v1562
        %v1601 = vunpack.c.l.b16 %v1563
        %v1602 = vunpack.c.l.b16 %v1564
        %v1603 = vunpack.c.l.b16 %v1565
        %v1604 = vunpack.c.l.b16 %v1566
        %v1605 = vunpack.c.l.b16 %v1567
        %v1606 = vpack.c.b16 %v1591, %v1590
        %v1607 = vpack.c.b16 %v1593, %v1592
        %v1608 = vpack.c.b16 %v1595, %v1594
        %v1609 = vpack.c.b16 %v1597, %v1596
        %v1610 = vpack.c.b16 %v1599, %v1598
        %v1611 = vpack.c.b16 %v1601, %v1600
        %v1612 = vpack.c.b16 %v1603, %v1602
        %v1613 = vpack.c.b16 %v1605, %v1604
        %1622 = vmatprep.subr.bf16.mxu0 0
        %1623 = vmatpush1.bf16.msra.mxu0 %v1613
        %1624 = vmatprep.subr.bf16.mxu0 0
        %1625 = vmatpush1.bf16.msra.mxu0 %v1612
        %1626 = vmatprep.subr.bf16.mxu0 0
        %1627 = vmatpush1.bf16.msra.mxu0 %v1611
        %1628 = vmatprep.subr.bf16.mxu0 0
        %1629 = vmatpush1.bf16.msra.mxu0 %v1610
        %1630 = vmatprep.subr.bf16.mxu0 0
        %1631 = vmatpush1.bf16.msra.mxu0 %v1609
        %1632 = vmatprep.subr.bf16.mxu0 0
        %1633 = vmatpush1.bf16.msra.mxu0 %v1608
        %1634 = vmatprep.subr.bf16.mxu0 0
        %1635 = vmatpush1.bf16.msra.mxu0 %v1607
        %1636 = vmatprep.subr.bf16.mxu0 0
        %1637 = vmatpush1.bf16.msra.mxu0 %v1606
        %1638 = vmatprep.subr.bf16.mxu0 0
        %1639 = vmatpush2.bf16.msra.mxu0 0
        %1640 = vmatprep.subr.bf16.mxu0 0
        %1641 = vmatpush2.bf16.msra.mxu0 0
        %1642 = vmatprep.subr.bf16.mxu0 0
        %1643 = vmatpush2.bf16.msra.mxu0 0
        %1644 = vmatprep.subr.bf16.mxu0 0
        %1645 = vmatpush2.bf16.msra.mxu0 0
        %1646 = vmatprep.subr.bf16.mxu0 0
        %1647 = vmatpush2.bf16.msra.mxu0 0
        %1648 = vmatprep.subr.bf16.mxu0 0
        %1649 = vmatpush2.bf16.msra.mxu0 0
        %1650 = vmatprep.subr.bf16.mxu0 0
        %1651 = vmatpush2.bf16.msra.mxu0 0
        %1652 = vmatprep.subr.bf16.mxu0 0
        %1653 = vmatpush2.bf16.msra.mxu0 0
        %1654 = vmatprep.mubr.bf16.mxu0 0
        %1655 = vmatmul.mubr.bf16.gmra.mxu0 %v1551
        %v1656 = vpop.f32.mrf.mxu0
        %v1657 = vadd.f32 %v1572, %v1656
        %v1658 = vpop.f32.mrf.mxu0
        %v1659 = vpop.f32.mrf.mxu0
        %v1660 = vpop.f32.mrf.mxu0
        %1661 = vdwg.mxu0
        %v1662 = vadd.f32 %v1408, %v1657
        %1663 = vst [vmem:[%s555] sm:$0xff] %v1662
        %s1664 = sand.u32 %s341, 1
        %s1665 = scalar_lea.sflag [#allocation4], %s1664
        %s1666 = sand.u32 %s341, 1
        %s1667 = smul.addr %s1666, 8
        %s1668 = scalar_lea.vmem [#allocation13], %s1667
        // Predicated region
        $region101: #{tpu_custom_call.1} parent=75 // pred_check
          %p1669 = pneg %p351
        $region102: #{tpu_custom_call.1} parent=75 // pred_check_branch
          %1671 = sbr.rel (%p1669) target = $region104
        $region103: #{tpu_custom_call.1} parent=75 // pred_region
          %s1673 = ssub.s32 128, 128
          %1674 = vsyncadd %s1665, %s1673
          %s1675 = smul.addr %s34, 128
          %s1676 = scalar_lea.hbm %s14, %s1675
          %s1678 = sshll.u32 %s1668, 4
          %s1679 = int_to_ptr.vmem [resolvable:$true] %s1678
          %1681 = dma.vmem_to_hbm [thread:$0]  %s1679, 128, %s1676, %s1665
        $region104: #{tpu_custom_call.1} parent=75 // pred_fallthru
          _
      $region76: #{tpu_custom_call.1} parent=5 // pred_fallthru
        _
      %p1682 = scmp.le.s32.totalorder 2, %s29
      // Predicated region
      $region105: #{tpu_custom_call.1} parent=5 // pred_check
        %p1683 = pneg %p1682
      $region106: #{tpu_custom_call.1} parent=5 // pred_check_branch
        %1685 = sbr.rel (%p1683) target = $region108
      $region107: #{tpu_custom_call.1} parent=5 // pred_region
        %s1686 = ssub.s32 %s29, 2
        // Predicated region
        $region109: #{tpu_custom_call.1} parent=107 // pred_check
          %p1687 = pneg %p357
        $region110: #{tpu_custom_call.1} parent=107 // pred_check_branch
          %1689 = sbr.rel (%p1687) target = $region112
        $region111: #{tpu_custom_call.1} parent=107 // pred_region
          %s1690 = sand.u32 %s342, 1
          %s1691 = scalar_lea.sflag [#allocation4], %s1690
          %s1692 = sand.u32 %s342, 1
          %s1693 = smul.addr %s1692, 8
          %s1694 = scalar_lea.vmem [#allocation13], %s1693
          %1695 = dma.done %s1691, 128
        $region112: #{tpu_custom_call.1} parent=107 // pred_fallthru
          _
      $region108: #{tpu_custom_call.1} parent=5 // pred_fallthru
        _
    $region6: #{tpu_custom_call.1} parent=1 // loop_footer
      %s33 = sadd.s32 1, %s29
    $region7: #{tpu_custom_call.1} parent=1 // loop_footer_branch
      %28 = sbr.rel target = $region3
    $region8: #{tpu_custom_call.1} parent=1 // loop_exit
      _
    %1696 = vsyncpa [#allocation3], 1
    %s1697 = scalar_lea.sflag [#allocation3], 1
    %1698 = vsyncpa %s1697, 1
    %1699 = vsyncpa [#allocation6], 1
    %1700 = vsyncpa [#allocation9], 1
    %1701 = vsyncpa [#allocation12], 1
    %1702 = vsyncpa [#allocation4], 1
    %s1703 = scalar_lea.sflag [#allocation4], 1
    %1704 = vsyncpa %s1703, 1

</llo_original>
